<compile_context>
chip_gen: v5e
topology: v5e:2x2
jax: 0.10.0
libtpu: 0.0.40
codegen_flags: <defaults>
</compile_context>

<pallas_src>
import jax
import jax.numpy as jnp
from jax.experimental import pallas as pl
from jax.experimental.pallas import tpu as pltpu


# ----------------------------------------------------------------------------
# Pallas kernel: fused 1x1-conv (matmul + bias) for ALL pyramid levels at once
# ----------------------------------------------------------------------------
def _head_kernel(*refs):
    # refs = (x_1..x_L, w_1..w_L, b_1..b_L, o_1..o_L)
    n_lv = len(refs) // 4
    x_refs = refs[0 * n_lv:1 * n_lv]
    w_refs = refs[1 * n_lv:2 * n_lv]
    b_refs = refs[2 * n_lv:3 * n_lv]
    o_refs = refs[3 * n_lv:4 * n_lv]
    for x_ref, w_ref, b_ref, o_ref in zip(x_refs, w_refs, b_refs, o_refs):
        y = jnp.dot(x_ref[...], w_ref[...], preferred_element_type=jnp.float32)
        o_ref[...] = y + b_ref[...]          # bias broadcast over rows, no activation


def _round_up(x, m):
    return (x + m - 1) // m * m


# ----------------------------------------------------------------------------
# Wrapper: NCHW in -> NCHW out, single pallas_call for all levels
# ----------------------------------------------------------------------------
def head_forward(params, feats):
    """feats: list of NCHW float32 arrays; returns list of NCHW (N, ch_out, H, W)."""
    ws = params["w"]           # list of (Cin_i, Cout_pad) f32, lane-padded once
    bs = params["b"]           # list of (1, Cout_pad) f32
    cout = params["cout"]      # true (unpadded) number of output channels
    cout_p = ws[0].shape[1]

    x2ds, shapes = [], []
    for x in feats:
        n, c, h, w = x.shape
        x_nhwc = jnp.transpose(x, (0, 2, 3, 1))        # channels -> TPU lanes
        x2ds.append(x_nhwc.reshape(n * h * w, c))
        shapes.append((n, h, w))

    ms = [a.shape[0] for a in x2ds]
    ks = [a.shape[1] for a in x2ds]

    # At most a 2-way "parallel" row split (v7x has 2 TensorCores); fall back to
    # whole-array blocks (exempt from the (8,128) rule) if rows don't split cleanly.
    grid_n = 2 if all(m % 16 == 0 for m in ms) else 1

    in_specs = (
        [pl.BlockSpec((m // grid_n, k), lambda g: (g, 0)) for m, k in zip(ms, ks)]
        + [pl.BlockSpec((k, cout_p), lambda g: (0, 0)) for k in ks]
        + [pl.BlockSpec((1, cout_p), lambda g: (0, 0)) for _ in ks]
    )
    out_specs = [pl.BlockSpec((m // grid_n, cout_p), lambda g: (g, 0)) for m in ms]
    out_shape = [jax.ShapeDtypeStruct((m, cout_p), jnp.float32) for m in ms]

    outs = pl.pallas_call(
        _head_kernel,
        out_shape=out_shape,
        grid=(grid_n,),
        in_specs=in_specs,
        out_specs=out_specs,
        compiler_params=pltpu.CompilerParams(
            dimension_semantics=("parallel",),
            vmem_limit_bytes=32 * 1024 * 1024,   # ample headroom even on v7x (64 MiB VMEM)
        ),
    )(*x2ds, *ws, *bs)

    results = []
    for (n, h, w), y in zip(shapes, outs):
        y = y[:, :cout].reshape(n, h, w, cout)            # drop lane padding
        results.append(jnp.transpose(y, (0, 3, 1, 2)))    # NHWC -> NCHW
    return results


# ----------------------------------------------------------------------------
# Deterministic synthetic parameters (nn.Conv2d-style uniform init)
# ----------------------------------------------------------------------------
def init_head(key, ch_in, num_class):
    cout = 3 * (num_class + 5)
    cout_p = _round_up(cout, 128)      # lane-dense output: pad 255 -> 256 once
    ws, bs = [], []
    for i, cin in enumerate(ch_in):
        kw, kb = jax.random.split(jax.random.fold_in(key, i))
        bound = float(cin) ** -0.5     # Conv2d default U(-1/sqrt(fan_in), +)
        w = jax.random.uniform(kw, (cin, cout), jnp.float32, -bound, bound)
        b = jax.random.uniform(kb, (cout,), jnp.float32, -bound, bound)
        ws.append(jnp.pad(w, ((0, 0), (0, cout_p - cout))))
        bs.append(jnp.pad(b, (0, cout_p - cout)).reshape(1, cout_p))
    return {"w": ws, "b": bs, "cout": cout}


# ----------------------------------------------------------------------------
if __name__ == "__main__":
    ch_in = (128, 256, 512)            # module defaults
    num_class = 80                     # -> ch_out = 255
    N = 2
    spatial = ((16, 16), (8, 8), (4, 4))   # small P3/P4/P5-style feature maps

    key = jax.random.PRNGKey(0)
    keys = jax.random.split(key, 1 + len(ch_in))
    kp, kx = keys[0], keys[1:]
    feats = [jax.random.normal(k, (N, c, h, w), jnp.float32)
             for k, c, (h, w) in zip(kx, ch_in, spatial)]
    params = init_head(kp, ch_in, num_class)

    run = jax.jit(lambda *fs: tuple(head_forward(params, list(fs))))
    outs = run(*feats)
    jax.block_until_ready(outs)

    cout = 3 * (num_class + 5)
    for y, c, (h, w) in zip(outs, ch_in, spatial):
        assert y.shape == (N, cout, h, w), y.shape

    # Pure-JAX reference check (1x1 conv == channel matmul).
    for x, y, w, b in zip(feats, outs, params["w"], params["b"]):
        ref = (jnp.einsum("nchw,cd->ndhw", x, w[:, :cout])
               + b[0, :cout][None, :, None, None])
        err = float(jnp.max(jnp.abs(y - ref)))
        assert jnp.allclose(y, ref, atol=2e-2, rtol=2e-2), err

    print("KERNEL_OK")
</pallas_src>

<mosaic_0001>
module attributes {stable_mosaic.version = 11 : i64} {
  func.func @_head_kernel(%arg0: i32, %arg1: memref<256x128xf32, #tpu.memory_space<vmem>>, %arg2: memref<64x256xf32, #tpu.memory_space<vmem>>, %arg3: memref<16x512xf32, #tpu.memory_space<vmem>>, %arg4: memref<128x256xf32, #tpu.memory_space<vmem>>, %arg5: memref<256x256xf32, #tpu.memory_space<vmem>>, %arg6: memref<512x256xf32, #tpu.memory_space<vmem>>, %arg7: memref<1x256xf32, #tpu.memory_space<vmem>>, %arg8: memref<1x256xf32, #tpu.memory_space<vmem>>, %arg9: memref<1x256xf32, #tpu.memory_space<vmem>>, %arg10: memref<256x256xf32, #tpu.memory_space<vmem>>, %arg11: memref<64x256xf32, #tpu.memory_space<vmem>>, %arg12: memref<16x256xf32, #tpu.memory_space<vmem>>) attributes {dimension_semantics = [#tpu.dimension_semantics<parallel>], iteration_bounds = array<i64: 2>, scalar_prefetch = 0 : i64, scratch_operands = 0 : i64, tpu.core_type = #tpu.core_type<tc>, window_params = [{transform_indices = @transform_0, window_bounds = array<i64: 256, 128>}, {transform_indices = @transform_1, window_bounds = array<i64: 64, 256>}, {transform_indices = @transform_2, window_bounds = array<i64: 16, 512>}, {pipeline_mode = #tpu.pipeline_mode<synchronous>, transform_indices = @transform_3, window_bounds = array<i64: 128, 256>}, {pipeline_mode = #tpu.pipeline_mode<synchronous>, transform_indices = @transform_4, window_bounds = array<i64: 256, 256>}, {pipeline_mode = #tpu.pipeline_mode<synchronous>, transform_indices = @transform_5, window_bounds = array<i64: 512, 256>}, {pipeline_mode = #tpu.pipeline_mode<synchronous>, transform_indices = @transform_6, window_bounds = array<i64: 1, 256>}, {pipeline_mode = #tpu.pipeline_mode<synchronous>, transform_indices = @transform_7, window_bounds = array<i64: 1, 256>}, {pipeline_mode = #tpu.pipeline_mode<synchronous>, transform_indices = @transform_8, window_bounds = array<i64: 1, 256>}, {transform_indices = @transform_9, window_bounds = array<i64: 256, 256>}, {transform_indices = @transform_10, window_bounds = array<i64: 64, 256>}, {transform_indices = @transform_11, window_bounds = array<i64: 16, 256>}]} {
    %c0 = arith.constant 0 : index
    %c0_0 = arith.constant 0 : index
    %0 = vector.load %arg1[%c0, %c0_0] : memref<256x128xf32, #tpu.memory_space<vmem>>, vector<256x128xf32>
    %c0_1 = arith.constant 0 : index
    %c0_2 = arith.constant 0 : index
    %1 = vector.load %arg4[%c0_1, %c0_2] : memref<128x256xf32, #tpu.memory_space<vmem>>, vector<128x256xf32>
    %cst = arith.constant dense<0.000000e+00> : vector<256x256xf32>
    %2 = tpu.matmul %0, %1, %cst {dimension_numbers = #tpu.dot_dimension_numbers<[1], [0], [0], [1], [0, 0, 1, 1], [], []>} : vector<256x128xf32>, vector<128x256xf32>, vector<256x256xf32> -> vector<256x256xf32>
    %c0_3 = arith.constant 0 : index
    %c0_4 = arith.constant 0 : index
    %3 = vector.load %arg7[%c0_3, %c0_4] : memref<1x256xf32, #tpu.memory_space<vmem>>, vector<1x256xf32>
    %4 = vector.broadcast %3 : vector<1x256xf32> to vector<256x256xf32>
    %5 = arith.addf %2, %4 : vector<256x256xf32>
    %c0_5 = arith.constant 0 : index
    %c0_6 = arith.constant 0 : index
    %6 = vector.load %arg10[%c0_5, %c0_6] : memref<256x256xf32, #tpu.memory_space<vmem>>, vector<256x256xf32>
    tpu.vector_store %arg10[%c0_5, %c0_6], %5 {strides = array<i32>} : memref<256x256xf32, #tpu.memory_space<vmem>>, vector<256x256xf32>,
    %c0_7 = arith.constant 0 : index
    %c0_8 = arith.constant 0 : index
    %7 = vector.load %arg2[%c0_7, %c0_8] : memref<64x256xf32, #tpu.memory_space<vmem>>, vector<64x256xf32>
    %c0_9 = arith.constant 0 : index
    %c0_10 = arith.constant 0 : index
    %8 = vector.load %arg5[%c0_9, %c0_10] : memref<256x256xf32, #tpu.memory_space<vmem>>, vector<256x256xf32>
    %cst_11 = arith.constant dense<0.000000e+00> : vector<64x256xf32>
    %9 = tpu.matmul %7, %8, %cst_11 {dimension_numbers = #tpu.dot_dimension_numbers<[1], [0], [0], [1], [0, 0, 1, 1], [], []>} : vector<64x256xf32>, vector<256x256xf32>, vector<64x256xf32> -> vector<64x256xf32>
    %c0_12 = arith.constant 0 : index
    %c0_13 = arith.constant 0 : index
    %10 = vector.load %arg8[%c0_12, %c0_13] : memref<1x256xf32, #tpu.memory_space<vmem>>, vector<1x256xf32>
    %11 = vector.broadcast %10 : vector<1x256xf32> to vector<64x256xf32>
    %12 = arith.addf %9, %11 : vector<64x256xf32>
    %c0_14 = arith.constant 0 : index
    %c0_15 = arith.constant 0 : index
    %13 = vector.load %arg11[%c0_14, %c0_15] : memref<64x256xf32, #tpu.memory_space<vmem>>, vector<64x256xf32>
    tpu.vector_store %arg11[%c0_14, %c0_15], %12 {strides = array<i32>} : memref<64x256xf32, #tpu.memory_space<vmem>>, vector<64x256xf32>,
    %c0_16 = arith.constant 0 : index
    %c0_17 = arith.constant 0 : index
    %14 = vector.load %arg3[%c0_16, %c0_17] : memref<16x512xf32, #tpu.memory_space<vmem>>, vector<16x512xf32>
    %c0_18 = arith.constant 0 : index
    %c0_19 = arith.constant 0 : index
    %15 = vector.load %arg6[%c0_18, %c0_19] : memref<512x256xf32, #tpu.memory_space<vmem>>, vector<512x256xf32>
    %cst_20 = arith.constant dense<0.000000e+00> : vector<16x256xf32>
    %16 = tpu.matmul %14, %15, %cst_20 {dimension_numbers = #tpu.dot_dimension_numbers<[1], [0], [0], [1], [0, 0, 1, 1], [], []>} : vector<16x512xf32>, vector<512x256xf32>, vector<16x256xf32> -> vector<16x256xf32>
    %c0_21 = arith.constant 0 : index
    %c0_22 = arith.constant 0 : index
    %17 = vector.load %arg9[%c0_21, %c0_22] : memref<1x256xf32, #tpu.memory_space<vmem>>, vector<1x256xf32>
    %18 = vector.broadcast %17 : vector<1x256xf32> to vector<16x256xf32>
    %19 = arith.addf %16, %18 : vector<16x256xf32>
    %c0_23 = arith.constant 0 : index
    %c0_24 = arith.constant 0 : index
    %20 = vector.load %arg12[%c0_23, %c0_24] : memref<16x256xf32, #tpu.memory_space<vmem>>, vector<16x256xf32>
    tpu.vector_store %arg12[%c0_23, %c0_24], %19 {strides = array<i32>} : memref<16x256xf32, #tpu.memory_space<vmem>>, vector<16x256xf32>,
    return
  }
  func.func @transform_0(%arg0: i32) -> (i32, i32) {
    %c0_i32 = arith.constant 0 : i32
    %c0_i32_0 = arith.constant 0 : i32
    return %arg0, %c0_i32 : i32, i32
  }
  func.func @transform_1(%arg0: i32) -> (i32, i32) {
    %c0_i32 = arith.constant 0 : i32
    %c0_i32_0 = arith.constant 0 : i32
    return %arg0, %c0_i32 : i32, i32
  }
  func.func @transform_2(%arg0: i32) -> (i32, i32) {
    %c0_i32 = arith.constant 0 : i32
    %c0_i32_0 = arith.constant 0 : i32
    return %arg0, %c0_i32 : i32, i32
  }
  func.func @transform_3(%arg0: i32) -> (i32, i32) {
    %c0_i32 = arith.constant 0 : i32
    %c0_i32_0 = arith.constant 0 : i32
    %c0_i32_1 = arith.constant 0 : i32
    return %c0_i32, %c0_i32_0 : i32, i32
  }
  func.func @transform_4(%arg0: i32) -> (i32, i32) {
    %c0_i32 = arith.constant 0 : i32
    %c0_i32_0 = arith.constant 0 : i32
    %c0_i32_1 = arith.constant 0 : i32
    return %c0_i32, %c0_i32_0 : i32, i32
  }
  func.func @transform_5(%arg0: i32) -> (i32, i32) {
    %c0_i32 = arith.constant 0 : i32
    %c0_i32_0 = arith.constant 0 : i32
    %c0_i32_1 = arith.constant 0 : i32
    return %c0_i32, %c0_i32_0 : i32, i32
  }
  func.func @transform_6(%arg0: i32) -> (i32, i32) {
    %c0_i32 = arith.constant 0 : i32
    %c0_i32_0 = arith.constant 0 : i32
    %c0_i32_1 = arith.constant 0 : i32
    return %c0_i32, %c0_i32_0 : i32, i32
  }
  func.func @transform_7(%arg0: i32) -> (i32, i32) {
    %c0_i32 = arith.constant 0 : i32
    %c0_i32_0 = arith.constant 0 : i32
    %c0_i32_1 = arith.constant 0 : i32
    return %c0_i32, %c0_i32_0 : i32, i32
  }
  func.func @transform_8(%arg0: i32) -> (i32, i32) {
    %c0_i32 = arith.constant 0 : i32
    %c0_i32_0 = arith.constant 0 : i32
    %c0_i32_1 = arith.constant 0 : i32
    return %c0_i32, %c0_i32_0 : i32, i32
  }
  func.func @transform_9(%arg0: i32) -> (i32, i32) {
    %c0_i32 = arith.constant 0 : i32
    %c0_i32_0 = arith.constant 0 : i32
    return %arg0, %c0_i32 : i32, i32
  }
  func.func @transform_10(%arg0: i32) -> (i32, i32) {
    %c0_i32 = arith.constant 0 : i32
    %c0_i32_0 = arith.constant 0 : i32
    return %arg0, %c0_i32 : i32, i32
  }
  func.func @transform_11(%arg0: i32) -> (i32, i32) {
    %c0_i32 = arith.constant 0 : i32
    %c0_i32_0 = arith.constant 0 : i32
    return %arg0, %c0_i32 : i32, i32
  }
}

</mosaic_0001>

<llo_original>
// kernel: _lambda_.1
$region0: #{_lambda_.1}
  #allocation0 [shape = 'u32[]', space=smem, size = 0x4, offset = 0x4, fixed_abs, tag = 'smem constant byte address 0x4 - core index']
  #allocation1 [shape = 'u32[72,128]{1,0:T(1,128)}', space=vmem, size = 0x9000, scoped, tag = 'internal scratch']
  %s0 = inlined_call_operand.hbm [shape: f32[512,128], index: 0, kind: input, shape index: {}]
  %s1 = inlined_call_operand.vmem [shape: f32[128,256], index: 1, kind: input, shape index: {}]
  %s2 = inlined_call_operand.vmem [shape: f32[32,512], index: 2, kind: input, shape index: {}]
  %s3 = inlined_call_operand.hbm [shape: f32[128,256], index: 3, kind: input, shape index: {}]
  %s4 = inlined_call_operand.hbm [shape: f32[256,256], index: 4, kind: input, shape index: {}]
  %s5 = inlined_call_operand.hbm [shape: f32[512,256], index: 5, kind: input, shape index: {}]
  %s6 = inlined_call_operand.vmem [shape: f32[1,256], index: 6, kind: input, shape index: {}]
  %s7 = inlined_call_operand.vmem [shape: f32[1,256], index: 7, kind: input, shape index: {}]
  %s8 = inlined_call_operand.vmem [shape: f32[1,256], index: 8, kind: input, shape index: {}]
  %s9 = inlined_call_operand.hbm [shape: f32[512,256], index: 9, kind: output, shape index: {0}]
  %s10 = inlined_call_operand.hbm [shape: f32[128,256], index: 10, kind: output, shape index: {1}]
  %s11 = inlined_call_operand.vmem [shape: f32[32,256], index: 11, kind: output, shape index: {2}]
  %12 = xla_tuple %s9, %s10, %s11
  %s13 = sld [smem:[#allocation0]]
  $region101: #{_lambda_.1} parent=0
    _
  %s15 = ssub.s32 1, %s13
  %s16 = scalar_select 0, %s15, %s13
  $region1: #{_lambda_.1} parent=0
    #allocation2 [shape = 'u8[262144]{0}', space=vmem, size = 0x40000, scoped, tag = 'input window, operand 0']
    #allocation3 [shape = 's32[2]{0}', space=sflag, size = 0x8, scoped, tag = 'scoped memory for _lambda_.1']
    #allocation4 [shape = 's32[2]{0}', space=sflag, size = 0x8, scoped, tag = 'scoped memory for _lambda_.1']
    #allocation5 [shape = 'u8[131072]{0}', space=vmem, size = 0x20000, scoped, tag = 'input window, operand 3, single buffered']
    #allocation6 [shape = 's32[1]{0}', space=sflag, size = 0x4, scoped, tag = 'scoped memory for _lambda_.1']
    #allocation7 [shape = 'u8[262144]{0}', space=vmem, size = 0x40000, scoped, tag = 'input window, operand 4, single buffered']
    #allocation8 [shape = 'u8[524288]{0}', space=vmem, size = 0x80000, scoped, tag = 'input window, operand 5, single buffered']
    #allocation9 [shape = 's32[1]{0}', space=sflag, size = 0x4, scoped, tag = 'scoped memory for _lambda_.1']
    #allocation10 [shape = 'u8[524288]{0}', space=vmem, size = 0x80000, scoped, tag = 'output window, operand 0']
    #allocation11 [shape = 'u8[131072]{0}', space=vmem, size = 0x20000, scoped, tag = 'output window, operand 1']
    #allocation12 [shape = 's32[2]{0}', space=sflag, size = 0x8, scoped, tag = 'scoped memory for _lambda_.1']
    %17 = vsyncpa [#allocation3], 0
    %s18 = scalar_lea.sflag [#allocation3], 1
    %19 = vsyncpa %s18, 0
    %20 = vsyncpa [#allocation6], 0
    %21 = vsyncpa [#allocation9], 0
    %22 = vsyncpa [#allocation4], 0
    %s23 = scalar_lea.sflag [#allocation4], 1
    %24 = vsyncpa %s23, 0
    %25 = vsyncpa [#allocation12], 0
    %s26 = scalar_lea.sflag [#allocation12], 1
    %27 = vsyncpa %s26, 0
    loop: start=0, step=1, limit=4
    $region2: #{_lambda_.1} parent=1 // loop_pre_header
      _
    $region3: #{_lambda_.1} parent=1 // loop_header
      %s29 = sphi 0, %s33
      %p30 = scmp.ge.s32.totalorder %s29, 4
      %s39 = sphi 0, %s41
      %s42 = sphi 0, %s39
      %s43 = sphi 0, %s42
      %s59 = sphi 0, %s43
      %s65 = sphi 0, %s67
      %s68 = sphi 0, %s65
      %s69 = sphi 0, %s68
      %s85 = sphi 0, %s69
      %s91 = sphi 0, %s93
      %s94 = sphi 0, %s91
      %s95 = sphi 0, %s94
      %s111 = sphi 0, %s95
      %s115 = sphi 0, %s115
      %s117 = sphi 0, %s115
      %s118 = sphi 0, %s117
      %s132 = sphi 0, %s118
      %s136 = sphi 0, %s136
      %s138 = sphi 0, %s136
      %s139 = sphi 0, %s138
      %s153 = sphi 0, %s139
      %s157 = sphi 0, %s157
      %s159 = sphi 0, %s157
      %s160 = sphi 0, %s159
      %s174 = sphi 0, %s160
      %s178 = sphi 0, %s178
      %s180 = sphi 0, %s178
      %s181 = sphi 0, %s180
      %s195 = sphi 0, %s181
      %s199 = sphi 0, %s199
      %s201 = sphi 0, %s199
      %s202 = sphi 0, %s201
      %s216 = sphi 0, %s202
      %s220 = sphi 0, %s220
      %s222 = sphi 0, %s220
      %s223 = sphi 0, %s222
      %s237 = sphi 0, %s223
      %s243 = sphi 0, %s245
      %s246 = sphi 0, %s243
      %s247 = sphi 0, %s246
      %s263 = sphi 0, %s247
      %s269 = sphi 0, %s271
      %s272 = sphi 0, %s269
      %s273 = sphi 0, %s272
      %s289 = sphi 0, %s273
      %s295 = sphi 0, %s297
      %s298 = sphi 0, %s295
      %s299 = sphi 0, %s298
      %s315 = sphi 0, %s299
    $region4: #{_lambda_.1} parent=1 // loop_header_branch
      %32 = sbr.rel (%p30) target = $region8
    $region5: #{_lambda_.1} parent=1 // loop_body
      %s34 = ssub.s32 %s29, 1
      %s35 = ssub.s32 %s29, 2
      %s36 = sadd.s32 %s29, 1
      %s37 = ssub.s32 %s29, %s36
      %p38 = scmp.eq.s32.totalorder %s37, 0
      %s40 = sadd.s32 %s39, 1
      %s41 = scalar_select %p38, %s39, %s40
      %p44 = pneg %p38
      %p45 = scmp.eq.s32.totalorder %s29, 1
      %p46 = por %p44, %p45
      %p47 = scmp.ne.s32.totalorder %s39, %s42
      %p48 = scmp.eq.s32.totalorder %s29, 0
      %p49 = por %p47, %p48
      %p50 = scmp.ne.s32.totalorder %s39, %s42
      %p51 = scmp.eq.s32.totalorder %s34, 1
      %p52 = por %p50, %p51
      %p53 = scmp.ne.s32.totalorder %s42, %s43
      %p54 = scmp.eq.s32.totalorder %s34, 0
      %p55 = por %p53, %p54
      %p56 = scmp.ne.s32.totalorder %s42, %s43
      %p57 = scmp.eq.s32.totalorder %s35, 1
      %p58 = por %p56, %p57
      %p60 = scmp.ne.s32.totalorder %s43, %s59
      %p61 = scmp.eq.s32.totalorder %s35, 0
      %p62 = por %p60, %p61
      %s63 = ssub.s32 %s29, %s36
      %p64 = scmp.eq.s32.totalorder %s63, 0
      %s66 = sadd.s32 %s65, 1
      %s67 = scalar_select %p64, %s65, %s66
      %p70 = pneg %p64
      %p71 = scmp.eq.s32.totalorder %s29, 1
      %p72 = por %p70, %p71
      %p73 = scmp.ne.s32.totalorder %s65, %s68
      %p74 = scmp.eq.s32.totalorder %s29, 0
      %p75 = por %p73, %p74
      %p76 = scmp.ne.s32.totalorder %s65, %s68
      %p77 = scmp.eq.s32.totalorder %s34, 1
      %p78 = por %p76, %p77
      %p79 = scmp.ne.s32.totalorder %s68, %s69
      %p80 = scmp.eq.s32.totalorder %s34, 0
      %p81 = por %p79, %p80
      %p82 = scmp.ne.s32.totalorder %s68, %s69
      %p83 = scmp.eq.s32.totalorder %s35, 1
      %p84 = por %p82, %p83
      %p86 = scmp.ne.s32.totalorder %s69, %s85
      %p87 = scmp.eq.s32.totalorder %s35, 0
      %p88 = por %p86, %p87
      %s89 = ssub.s32 %s29, %s36
      %p90 = scmp.eq.s32.totalorder %s89, 0
      %s92 = sadd.s32 %s91, 1
      %s93 = scalar_select %p90, %s91, %s92
      %p96 = pneg %p90
      %p97 = scmp.eq.s32.totalorder %s29, 1
      %p98 = por %p96, %p97
      %p99 = scmp.ne.s32.totalorder %s91, %s94
      %p100 = scmp.eq.s32.totalorder %s29, 0
      %p101 = por %p99, %p100
      %p102 = scmp.ne.s32.totalorder %s91, %s94
      %p103 = scmp.eq.s32.totalorder %s34, 1
      %p104 = por %p102, %p103
      %p105 = scmp.ne.s32.totalorder %s94, %s95
      %p106 = scmp.eq.s32.totalorder %s34, 0
      %p107 = por %p105, %p106
      %p108 = scmp.ne.s32.totalorder %s94, %s95
      %p109 = scmp.eq.s32.totalorder %s35, 1
      %p110 = por %p108, %p109
      %p112 = scmp.ne.s32.totalorder %s95, %s111
      %p113 = scmp.eq.s32.totalorder %s35, 0
      %p114 = por %p112, %p113
      %s116 = sadd.s32 %s115, 1
      %p119 = scmp.eq.s32.totalorder %s29, 1
      %p120 = scmp.ne.s32.totalorder %s115, %s117
      %p121 = scmp.eq.s32.totalorder %s29, 0
      %p122 = por %p120, %p121
      %p123 = scmp.ne.s32.totalorder %s115, %s117
      %p124 = scmp.eq.s32.totalorder %s34, 1
      %p125 = por %p123, %p124
      %p126 = scmp.ne.s32.totalorder %s117, %s118
      %p127 = scmp.eq.s32.totalorder %s34, 0
      %p128 = por %p126, %p127
      %p129 = scmp.ne.s32.totalorder %s117, %s118
      %p130 = scmp.eq.s32.totalorder %s35, 1
      %p131 = por %p129, %p130
      %p133 = scmp.ne.s32.totalorder %s118, %s132
      %p134 = scmp.eq.s32.totalorder %s35, 0
      %p135 = por %p133, %p134
      %s137 = sadd.s32 %s136, 1
      %p140 = scmp.eq.s32.totalorder %s29, 1
      %p141 = scmp.ne.s32.totalorder %s136, %s138
      %p142 = scmp.eq.s32.totalorder %s29, 0
      %p143 = por %p141, %p142
      %p144 = scmp.ne.s32.totalorder %s136, %s138
      %p145 = scmp.eq.s32.totalorder %s34, 1
      %p146 = por %p144, %p145
      %p147 = scmp.ne.s32.totalorder %s138, %s139
      %p148 = scmp.eq.s32.totalorder %s34, 0
      %p149 = por %p147, %p148
      %p150 = scmp.ne.s32.totalorder %s138, %s139
      %p151 = scmp.eq.s32.totalorder %s35, 1
      %p152 = por %p150, %p151
      %p154 = scmp.ne.s32.totalorder %s139, %s153
      %p155 = scmp.eq.s32.totalorder %s35, 0
      %p156 = por %p154, %p155
      %s158 = sadd.s32 %s157, 1
      %p161 = scmp.eq.s32.totalorder %s29, 1
      %p162 = scmp.ne.s32.totalorder %s157, %s159
      %p163 = scmp.eq.s32.totalorder %s29, 0
      %p164 = por %p162, %p163
      %p165 = scmp.ne.s32.totalorder %s157, %s159
      %p166 = scmp.eq.s32.totalorder %s34, 1
      %p167 = por %p165, %p166
      %p168 = scmp.ne.s32.totalorder %s159, %s160
      %p169 = scmp.eq.s32.totalorder %s34, 0
      %p170 = por %p168, %p169
      %p171 = scmp.ne.s32.totalorder %s159, %s160
      %p172 = scmp.eq.s32.totalorder %s35, 1
      %p173 = por %p171, %p172
      %p175 = scmp.ne.s32.totalorder %s160, %s174
      %p176 = scmp.eq.s32.totalorder %s35, 0
      %p177 = por %p175, %p176
      %s179 = sadd.s32 %s178, 1
      %p182 = scmp.eq.s32.totalorder %s29, 1
      %p183 = scmp.ne.s32.totalorder %s178, %s180
      %p184 = scmp.eq.s32.totalorder %s29, 0
      %p185 = por %p183, %p184
      %p186 = scmp.ne.s32.totalorder %s178, %s180
      %p187 = scmp.eq.s32.totalorder %s34, 1
      %p188 = por %p186, %p187
      %p189 = scmp.ne.s32.totalorder %s180, %s181
      %p190 = scmp.eq.s32.totalorder %s34, 0
      %p191 = por %p189, %p190
      %p192 = scmp.ne.s32.totalorder %s180, %s181
      %p193 = scmp.eq.s32.totalorder %s35, 1
      %p194 = por %p192, %p193
      %p196 = scmp.ne.s32.totalorder %s181, %s195
      %p197 = scmp.eq.s32.totalorder %s35, 0
      %p198 = por %p196, %p197
      %s200 = sadd.s32 %s199, 1
      %p203 = scmp.eq.s32.totalorder %s29, 1
      %p204 = scmp.ne.s32.totalorder %s199, %s201
      %p205 = scmp.eq.s32.totalorder %s29, 0
      %p206 = por %p204, %p205
      %p207 = scmp.ne.s32.totalorder %s199, %s201
      %p208 = scmp.eq.s32.totalorder %s34, 1
      %p209 = por %p207, %p208
      %p210 = scmp.ne.s32.totalorder %s201, %s202
      %p211 = scmp.eq.s32.totalorder %s34, 0
      %p212 = por %p210, %p211
      %p213 = scmp.ne.s32.totalorder %s201, %s202
      %p214 = scmp.eq.s32.totalorder %s35, 1
      %p215 = por %p213, %p214
      %p217 = scmp.ne.s32.totalorder %s202, %s216
      %p218 = scmp.eq.s32.totalorder %s35, 0
      %p219 = por %p217, %p218
      %s221 = sadd.s32 %s220, 1
      %p224 = scmp.eq.s32.totalorder %s29, 1
      %p225 = scmp.ne.s32.totalorder %s220, %s222
      %p226 = scmp.eq.s32.totalorder %s29, 0
      %p227 = por %p225, %p226
      %p228 = scmp.ne.s32.totalorder %s220, %s222
      %p229 = scmp.eq.s32.totalorder %s34, 1
      %p230 = por %p228, %p229
      %p231 = scmp.ne.s32.totalorder %s222, %s223
      %p232 = scmp.eq.s32.totalorder %s34, 0
      %p233 = por %p231, %p232
      %p234 = scmp.ne.s32.totalorder %s222, %s223
      %p235 = scmp.eq.s32.totalorder %s35, 1
      %p236 = por %p234, %p235
      %p238 = scmp.ne.s32.totalorder %s223, %s237
      %p239 = scmp.eq.s32.totalorder %s35, 0
      %p240 = por %p238, %p239
      %s241 = ssub.s32 %s29, %s36
      %p242 = scmp.eq.s32.totalorder %s241, 0
      %s244 = sadd.s32 %s243, 1
      %s245 = scalar_select %p242, %s243, %s244
      %p248 = pneg %p242
      %p249 = scmp.eq.s32.totalorder %s29, 1
      %p250 = por %p248, %p249
      %p251 = scmp.ne.s32.totalorder %s243, %s246
      %p252 = scmp.eq.s32.totalorder %s29, 0
      %p253 = por %p251, %p252
      %p254 = scmp.ne.s32.totalorder %s243, %s246
      %p255 = scmp.eq.s32.totalorder %s34, 1
      %p256 = por %p254, %p255
      %p257 = scmp.ne.s32.totalorder %s246, %s247
      %p258 = scmp.eq.s32.totalorder %s34, 0
      %p259 = por %p257, %p258
      %p260 = scmp.ne.s32.totalorder %s246, %s247
      %p261 = scmp.eq.s32.totalorder %s35, 1
      %p262 = por %p260, %p261
      %p264 = scmp.ne.s32.totalorder %s247, %s263
      %p265 = scmp.eq.s32.totalorder %s35, 0
      %p266 = por %p264, %p265
      %s267 = ssub.s32 %s29, %s36
      %p268 = scmp.eq.s32.totalorder %s267, 0
      %s270 = sadd.s32 %s269, 1
      %s271 = scalar_select %p268, %s269, %s270
      %p274 = pneg %p268
      %p275 = scmp.eq.s32.totalorder %s29, 1
      %p276 = por %p274, %p275
      %p277 = scmp.ne.s32.totalorder %s269, %s272
      %p278 = scmp.eq.s32.totalorder %s29, 0
      %p279 = por %p277, %p278
      %p280 = scmp.ne.s32.totalorder %s269, %s272
      %p281 = scmp.eq.s32.totalorder %s34, 1
      %p282 = por %p280, %p281
      %p283 = scmp.ne.s32.totalorder %s272, %s273
      %p284 = scmp.eq.s32.totalorder %s34, 0
      %p285 = por %p283, %p284
      %p286 = scmp.ne.s32.totalorder %s272, %s273
      %p287 = scmp.eq.s32.totalorder %s35, 1
      %p288 = por %p286, %p287
      %p290 = scmp.ne.s32.totalorder %s273, %s289
      %p291 = scmp.eq.s32.totalorder %s35, 0
      %p292 = por %p290, %p291
      %s293 = ssub.s32 %s29, %s36
      %p294 = scmp.eq.s32.totalorder %s293, 0
      %s296 = sadd.s32 %s295, 1
      %s297 = scalar_select %p294, %s295, %s296
      %p300 = pneg %p294
      %p301 = scmp.eq.s32.totalorder %s29, 1
      %p302 = por %p300, %p301
      %p303 = scmp.ne.s32.totalorder %s295, %s298
      %p304 = scmp.eq.s32.totalorder %s29, 0
      %p305 = por %p303, %p304
      %p306 = scmp.ne.s32.totalorder %s295, %s298
      %p307 = scmp.eq.s32.totalorder %s34, 1
      %p308 = por %p306, %p307
      %p309 = scmp.ne.s32.totalorder %s298, %s299
      %p310 = scmp.eq.s32.totalorder %s34, 0
      %p311 = por %p309, %p310
      %p312 = scmp.ne.s32.totalorder %s298, %s299
      %p313 = scmp.eq.s32.totalorder %s35, 1
      %p314 = por %p312, %p313
      %p316 = scmp.ne.s32.totalorder %s299, %s315
      %p317 = scmp.eq.s32.totalorder %s35, 0
      %p318 = por %p316, %p317
      %p319 = scmp.le.s32.totalorder 1, %s29
      %p320 = scmp.lt.s32.totalorder %s29, 3
      %p321 = pnand %p319, %p320
      %p322 = pneg %p321
      // Predicated region
      $region9: #{_lambda_.1} parent=5 // pred_check
        _
      $region10: #{_lambda_.1} parent=5 // pred_check_branch
        %324 = sbr.rel (%p321) target = $region12
      $region11: #{_lambda_.1} parent=5 // pred_region
        %s325 = ssub.s32 %s29, 1
        // Predicated region
        $region13: #{_lambda_.1} parent=11 // pred_check
          %p326 = pneg %p128
        $region14: #{_lambda_.1} parent=11 // pred_check_branch
          %328 = sbr.rel (%p326) target = $region16
        $region15: #{_lambda_.1} parent=11 // pred_region
          %330 = vsyncadd [#allocation6], 0
          %s331 = sshll.u32 %s3, 4
          %s332 = int_to_ptr.hbm [resolvable:$true] %s331
          %s333 = sshll.u32 [#allocation5], 4
          %s334 = int_to_ptr.vmem [resolvable:$true] %s333
          %339 = dma.hbm_to_vmem [thread:$0]  %s332, 4096, %s334, [#allocation6], 256, 256, 16
        $region16: #{_lambda_.1} parent=11 // pred_fallthru
          _
        // Predicated region
        $region17: #{_lambda_.1} parent=11 // pred_check
          %p340 = pneg %p149
        $region18: #{_lambda_.1} parent=11 // pred_check_branch
          %342 = sbr.rel (%p340) target = $region20
        $region19: #{_lambda_.1} parent=11 // pred_region
          %344 = vsyncadd [#allocation6], 0
          %s345 = sshll.u32 %s4, 4
          %s346 = int_to_ptr.hbm [resolvable:$true] %s345
          %s347 = sshll.u32 [#allocation7], 4
          %s348 = int_to_ptr.vmem [resolvable:$true] %s347
          %353 = dma.hbm_to_vmem [thread:$0]  %s346, 8192, %s348, [#allocation6], 256, 256, 16
        $region20: #{_lambda_.1} parent=11 // pred_fallthru
          _
        // Predicated region
        $region21: #{_lambda_.1} parent=11 // pred_check
          %p354 = pneg %p170
        $region22: #{_lambda_.1} parent=11 // pred_check_branch
          %356 = sbr.rel (%p354) target = $region24
        $region23: #{_lambda_.1} parent=11 // pred_region
          %358 = vsyncadd [#allocation9], 0
          %s359 = sshll.u32 %s5, 4
          %s360 = int_to_ptr.hbm [resolvable:$true] %s359
          %s361 = sshll.u32 [#allocation8], 4
          %s362 = int_to_ptr.vmem [resolvable:$true] %s361
          %367 = dma.hbm_to_vmem [thread:$0]  %s360, 16384, %s362, [#allocation9], 256, 256, 16
        $region24: #{_lambda_.1} parent=11 // pred_fallthru
          _
        // Predicated region
        $region25: #{_lambda_.1} parent=11 // pred_check
          %p368 = pneg %p191
        $region26: #{_lambda_.1} parent=11 // pred_check_branch
          %370 = sbr.rel (%p368) target = $region28
        $region27: #{_lambda_.1} parent=11 // pred_region
          _
        $region28: #{_lambda_.1} parent=11 // pred_fallthru
          _
        // Predicated region
        $region29: #{_lambda_.1} parent=11 // pred_check
          %p371 = pneg %p212
        $region30: #{_lambda_.1} parent=11 // pred_check_branch
          %373 = sbr.rel (%p371) target = $region32
        $region31: #{_lambda_.1} parent=11 // pred_region
          _
        $region32: #{_lambda_.1} parent=11 // pred_fallthru
          _
        // Predicated region
        $region33: #{_lambda_.1} parent=11 // pred_check
          %p374 = pneg %p233
        $region34: #{_lambda_.1} parent=11 // pred_check_branch
          %376 = sbr.rel (%p374) target = $region36
        $region35: #{_lambda_.1} parent=11 // pred_region
          _
        $region36: #{_lambda_.1} parent=11 // pred_fallthru
          _
      $region12: #{_lambda_.1} parent=5 // pred_fallthru
        _
      %p377 = scmp.lt.s32.totalorder %s29, 2
      // Predicated region
      $region37: #{_lambda_.1} parent=5 // pred_check
        %p378 = pneg %p377
      $region38: #{_lambda_.1} parent=5 // pred_check_branch
        %380 = sbr.rel (%p378) target = $region40
      $region39: #{_lambda_.1} parent=5 // pred_region
        // Predicated region
        $region41: #{_lambda_.1} parent=39 // pred_check
          %p381 = pneg %p49
        $region42: #{_lambda_.1} parent=39 // pred_check_branch
          %383 = sbr.rel (%p381) target = $region44
        $region43: #{_lambda_.1} parent=39 // pred_region
          %s384 = sand.u32 %s39, 1
          %s385 = scalar_lea.sflag [#allocation3], %s384
          %s386 = sand.u32 %s39, 1
          %s387 = smul.addr %s386, 256
          %s388 = scalar_lea.vmem [#allocation2], %s387
          %s389 = smul.u32 32, %s29
          %391 = vsyncadd %s385, 0
          %s392 = smul.addr %s389, 8
          %s393 = scalar_lea.hbm %s0, %s392
          %s394 = sshll.u32 %s393, 4
          %s395 = int_to_ptr.hbm [resolvable:$true] %s394
          %s396 = sshll.u32 %s388, 4
          %s397 = int_to_ptr.vmem [resolvable:$true] %s396
          %402 = dma.hbm_to_vmem [thread:$0]  %s395, 4096, %s397, %s385, 128, 128, 8
        $region44: #{_lambda_.1} parent=39 // pred_fallthru
          _
        // Predicated region
        $region45: #{_lambda_.1} parent=39 // pred_check
          %p403 = pneg %p75
        $region46: #{_lambda_.1} parent=39 // pred_check_branch
          %405 = sbr.rel (%p403) target = $region48
        $region47: #{_lambda_.1} parent=39 // pred_region
          %s406 = smul.u32 8, %s29
          %p407 = scmp.lt.s32.totalorder %s406, 15
          %s408 = scalar_select %p407, %s406, 15
          %s409 = smul.addr %s408, 2
          %s410 = smul.addr %s409, 8
          %s411 = scalar_lea.vmem %s1, %s410
          %s412 = smul.u32 8, %s29
        $region48: #{_lambda_.1} parent=39 // pred_fallthru
          _
        // Predicated region
        $region49: #{_lambda_.1} parent=39 // pred_check
          %p413 = pneg %p101
        $region50: #{_lambda_.1} parent=39 // pred_check_branch
          %415 = sbr.rel (%p413) target = $region52
        $region51: #{_lambda_.1} parent=39 // pred_region
          %s416 = smul.u32 2, %s29
          %p417 = scmp.lt.s32.totalorder %s416, 3
          %s418 = scalar_select %p417, %s416, 3
          %s419 = smul.addr %s418, 4
          %s420 = smul.addr %s419, 8
          %s421 = scalar_lea.vmem %s2, %s420
          %s422 = smul.u32 2, %s29
        $region52: #{_lambda_.1} parent=39 // pred_fallthru
          _
      $region40: #{_lambda_.1} parent=5 // pred_fallthru
        _
      %p423 = scmp.le.s32.totalorder 1, %s29
      %p424 = scmp.lt.s32.totalorder %s29, 3
      %p425 = pnand %p423, %p424
      %p426 = pneg %p425
      // Predicated region
      $region53: #{_lambda_.1} parent=5 // pred_check
        _
      $region54: #{_lambda_.1} parent=5 // pred_check_branch
        %428 = sbr.rel (%p425) target = $region56
      $region55: #{_lambda_.1} parent=5 // pred_region
        %s429 = ssub.s32 %s29, 1
        %s430 = sand.u32 %s42, 1
        %s431 = scalar_lea.sflag [#allocation3], %s430
        %s432 = sand.u32 %s42, 1
        %s433 = smul.addr %s432, 256
        %s434 = scalar_lea.vmem [#allocation2], %s433
        // Predicated region
        $region57: #{_lambda_.1} parent=55 // pred_check
          %p435 = pneg %p55
        $region58: #{_lambda_.1} parent=55 // pred_check_branch
          %437 = sbr.rel (%p435) target = $region60
        $region59: #{_lambda_.1} parent=55 // pred_region
          %439 = dma.done %s431, 4096
        $region60: #{_lambda_.1} parent=55 // pred_fallthru
          _
        // Predicated region
        $region61: #{_lambda_.1} parent=55 // pred_check
          %p440 = pneg %p128
        $region62: #{_lambda_.1} parent=55 // pred_check_branch
          %442 = sbr.rel (%p440) target = $region64
        $region63: #{_lambda_.1} parent=55 // pred_region
          %444 = dma.done [#allocation6], 4096
        $region64: #{_lambda_.1} parent=55 // pred_fallthru
          _
        // Predicated region
        $region65: #{_lambda_.1} parent=55 // pred_check
          %p445 = pneg %p149
        $region66: #{_lambda_.1} parent=55 // pred_check_branch
          %447 = sbr.rel (%p445) target = $region68
        $region67: #{_lambda_.1} parent=55 // pred_region
          %449 = dma.done [#allocation6], 8192
        $region68: #{_lambda_.1} parent=55 // pred_fallthru
          _
        // Predicated region
        $region69: #{_lambda_.1} parent=55 // pred_check
          %p450 = pneg %p170
        $region70: #{_lambda_.1} parent=55 // pred_check_branch
          %452 = sbr.rel (%p450) target = $region72
        $region71: #{_lambda_.1} parent=55 // pred_region
          %454 = dma.done [#allocation9], 16384
        $region72: #{_lambda_.1} parent=55 // pred_fallthru
          _
        %s455 = sand.u32 %s42, 1
        %s456 = scalar_lea.sflag [#allocation3], %s455
        %s457 = sand.u32 %s42, 1
        %s458 = smul.addr %s457, 256
        %s459 = scalar_lea.vmem [#allocation2], %s458
        %p460 = pneg %p55
        %p461 = pneg %p52
        %s462 = smul.u32 8, %s34
        %p463 = scmp.lt.s32.totalorder %s462, 15
        %s464 = scalar_select %p463, %s462, 15
        %s465 = smul.addr %s464, 2
        %s466 = smul.addr %s465, 8
        %s467 = scalar_lea.vmem %s1, %s466
        %p468 = pneg %p81
        %p469 = pneg %p78
        %s470 = smul.u32 2, %s34
        %p471 = scmp.lt.s32.totalorder %s470, 3
        %s472 = scalar_select %p471, %s470, 3
        %s473 = smul.addr %s472, 4
        %s474 = smul.addr %s473, 8
        %s475 = scalar_lea.vmem %s2, %s474
        %p476 = pneg %p107
        %p477 = pneg %p104
        %p478 = pneg %p128
        %p479 = pneg %p125
        %p480 = pneg %p149
        %p481 = pneg %p146
        %p482 = pneg %p170
        %p483 = pneg %p167
        %p484 = pneg %p191
        %p485 = pneg %p188
        %p486 = pneg %p212
        %p487 = pneg %p209
        %p488 = pneg %p233
        %p489 = pneg %p230
        %p490 = pneg %p259
        %p491 = pneg %p256
        %s492 = sand.u32 %s246, 1
        %s493 = scalar_lea.sflag [#allocation4], %s492
        %s494 = sand.u32 %s246, 1
        %s495 = smul.addr %s494, 512
        %s496 = scalar_lea.vmem [#allocation10], %s495
        %p497 = pneg %p285
        %p498 = pneg %p282
        %s499 = sand.u32 %s272, 1
        %s500 = scalar_lea.sflag [#allocation12], %s499
        %s501 = sand.u32 %s272, 1
        %s502 = smul.addr %s501, 128
        %s503 = scalar_lea.vmem [#allocation11], %s502
        %p504 = pneg %p311
        %p505 = pneg %p308
        %s506 = smul.u32 2, %s34
        %p507 = scmp.lt.s32.totalorder %s506, 3
        %s508 = scalar_select %p507, %s506, 3
        %s509 = smul.addr %s508, 2
        %s510 = smul.addr %s509, 8
        %s511 = scalar_lea.vmem %s11, %s510
        %s512 = smul.u32 32, %s34
        %s513 = smul.u32 8, %s34
        %p514 = scmp.lt.s32.totalorder %s513, 15
        %s515 = scalar_select %p514, %s513, 15
        %s516 = smul.addr %s515, 2
        %s517 = smul.addr %s516, 8
        %s518 = scalar_lea.vmem %s1, %s517
        %s519 = smul.u32 8, %s34
        %s520 = smul.u32 2, %s34
        %p521 = scmp.lt.s32.totalorder %s520, 3
        %s522 = scalar_select %p521, %s520, 3
        %s523 = smul.addr %s522, 4
        %s524 = smul.addr %s523, 8
        %s525 = scalar_lea.vmem %s2, %s524
        %s526 = smul.u32 2, %s34
        %s527 = smul.u32 32, %s34
        %s528 = smul.u32 8, %s34
        %s529 = smul.u32 2, %s34
        %p530 = scmp.lt.s32.totalorder %s529, 3
        %s531 = scalar_select %p530, %s529, 3
        %s532 = smul.addr %s531, 2
        %s533 = smul.addr %s532, 8
        %s534 = scalar_lea.vmem %s11, %s533
        %s535 = smul.u32 2, %s34
        %v536 = vld [vmem:[%s434] sm:$0xff]
        %v537 = vld [vmem:[%s434 + $0x8] sm:$0xff]
        %v538 = vld [vmem:[%s434 + $0x10] sm:$0xff]
        %v539 = vld [vmem:[%s434 + $0x18] sm:$0xff]
        %v540 = vld [vmem:[%s434 + $0x20] sm:$0xff]
        %v541 = vld [vmem:[%s434 + $0x28] sm:$0xff]
        %v542 = vld [vmem:[%s434 + $0x30] sm:$0xff]
        %v543 = vld [vmem:[%s434 + $0x38] sm:$0xff]
        %v544 = vld [vmem:[%s434 + $0x40] sm:$0xff]
        %v545 = vld [vmem:[%s434 + $0x48] sm:$0xff]
        %v546 = vld [vmem:[%s434 + $0x50] sm:$0xff]
        %v547 = vld [vmem:[%s434 + $0x58] sm:$0xff]
        %v548 = vld [vmem:[%s434 + $0x60] sm:$0xff]
        %v549 = vld [vmem:[%s434 + $0x68] sm:$0xff]
        %v550 = vld [vmem:[%s434 + $0x70] sm:$0xff]
        %v551 = vld [vmem:[%s434 + $0x78] sm:$0xff]
        %v552 = vld [vmem:[%s434 + $0x80] sm:$0xff]
        %v553 = vld [vmem:[%s434 + $0x88] sm:$0xff]
        %v554 = vld [vmem:[%s434 + $0x90] sm:$0xff]
        %v555 = vld [vmem:[%s434 + $0x98] sm:$0xff]
        %v556 = vld [vmem:[%s434 + $0xa0] sm:$0xff]
        %v557 = vld [vmem:[%s434 + $0xa8] sm:$0xff]
        %v558 = vld [vmem:[%s434 + $0xb0] sm:$0xff]
        %v559 = vld [vmem:[%s434 + $0xb8] sm:$0xff]
        %v560 = vld [vmem:[%s434 + $0xc0] sm:$0xff]
        %v561 = vld [vmem:[%s434 + $0xc8] sm:$0xff]
        %v562 = vld [vmem:[%s434 + $0xd0] sm:$0xff]
        %v563 = vld [vmem:[%s434 + $0xd8] sm:$0xff]
        %v564 = vld [vmem:[%s434 + $0xe0] sm:$0xff]
        %v565 = vld [vmem:[%s434 + $0xe8] sm:$0xff]
        %v566 = vld [vmem:[%s434 + $0xf0] sm:$0xff]
        %v567 = vld [vmem:[%s434 + $0xf8] sm:$0xff]
        %v568 = vld [vmem:[#allocation5] sm:$0xff]
        %v569 = vld [vmem:[#allocation5 + $0x8] sm:$0xff]
        %v570 = vld [vmem:[#allocation5 + $0x10] sm:$0xff]
        %v571 = vld [vmem:[#allocation5 + $0x18] sm:$0xff]
        %v572 = vld [vmem:[#allocation5 + $0x20] sm:$0xff]
        %v573 = vld [vmem:[#allocation5 + $0x28] sm:$0xff]
        %v574 = vld [vmem:[#allocation5 + $0x30] sm:$0xff]
        %v575 = vld [vmem:[#allocation5 + $0x38] sm:$0xff]
        %v576 = vld [vmem:[#allocation5 + $0x40] sm:$0xff]
        %v577 = vld [vmem:[#allocation5 + $0x48] sm:$0xff]
        %v578 = vld [vmem:[#allocation5 + $0x50] sm:$0xff]
        %v579 = vld [vmem:[#allocation5 + $0x58] sm:$0xff]
        %v580 = vld [vmem:[#allocation5 + $0x60] sm:$0xff]
        %v581 = vld [vmem:[#allocation5 + $0x68] sm:$0xff]
        %v582 = vld [vmem:[#allocation5 + $0x70] sm:$0xff]
        %v583 = vld [vmem:[#allocation5 + $0x78] sm:$0xff]
        %v584 = vld [vmem:[#allocation5 + $0x80] sm:$0xff]
        %v585 = vld [vmem:[#allocation5 + $0x88] sm:$0xff]
        %v586 = vld [vmem:[#allocation5 + $0x90] sm:$0xff]
        %v587 = vld [vmem:[#allocation5 + $0x98] sm:$0xff]
        %v588 = vld [vmem:[#allocation5 + $0xa0] sm:$0xff]
        %v589 = vld [vmem:[#allocation5 + $0xa8] sm:$0xff]
        %v590 = vld [vmem:[#allocation5 + $0xb0] sm:$0xff]
        %v591 = vld [vmem:[#allocation5 + $0xb8] sm:$0xff]
        %v592 = vld [vmem:[#allocation5 + $0xc0] sm:$0xff]
        %v593 = vld [vmem:[#allocation5 + $0xc8] sm:$0xff]
        %v594 = vld [vmem:[#allocation5 + $0xd0] sm:$0xff]
        %v595 = vld [vmem:[#allocation5 + $0xd8] sm:$0xff]
        %v596 = vld [vmem:[#allocation5 + $0xe0] sm:$0xff]
        %v597 = vld [vmem:[#allocation5 + $0xe8] sm:$0xff]
        %v598 = vld [vmem:[#allocation5 + $0xf0] sm:$0xff]
        %v599 = vld [vmem:[#allocation5 + $0xf8] sm:$0xff]
        %v600 = vld [vmem:[%s6] sm:$0x3]
        %v602 = vperm.slane %v600, 0
        %v603 = vperm.slane %v600, 1
        %606 = vmatpush.msra.mxu0 %v598
        %607 = vmatpush.msra.mxu0 %v596
        %608 = vmatpush.msra.mxu0 %v594
        %609 = vmatpush.msra.mxu0 %v592
        %610 = vmatpush.msra.mxu0 %v590
        %611 = vmatpush.msra.mxu0 %v588
        %612 = vmatpush.msra.mxu0 %v586
        %613 = vmatpush.msra.mxu0 %v584
        %614 = vmatpush.msra.mxu0 %v582
        %615 = vmatpush.msra.mxu0 %v580
        %616 = vmatpush.msra.mxu0 %v578
        %617 = vmatpush.msra.mxu0 %v576
        %618 = vmatpush.msra.mxu0 %v574
        %619 = vmatpush.msra.mxu0 %v572
        %620 = vmatpush.msra.mxu0 %v570
        %621 = vmatpush.msra.mxu0 %v568
        %622 = vmatmul.f32.gmra.mxu0 %v536
        %v623 = vpop.f32.mrf.mxu0
        %v624 = vadd.f32 %v602, %v623
        %625 = vmatmul.f32.gmra.mxu0 %v537
        %v626 = vpop.f32.mrf.mxu0
        %v627 = vadd.f32 %v602, %v626
        %628 = vmatmul.f32.gmra.mxu0 %v538
        %v629 = vpop.f32.mrf.mxu0
        %v630 = vadd.f32 %v602, %v629
        %631 = vmatmul.f32.gmra.mxu0 %v539
        %v632 = vpop.f32.mrf.mxu0
        %v633 = vadd.f32 %v602, %v632
        %634 = vmatmul.f32.gmra.mxu0 %v540
        %v635 = vpop.f32.mrf.mxu0
        %v636 = vadd.f32 %v602, %v635
        %637 = vmatmul.f32.gmra.mxu0 %v541
        %v638 = vpop.f32.mrf.mxu0
        %v639 = vadd.f32 %v602, %v638
        %640 = vmatmul.f32.gmra.mxu0 %v542
        %v641 = vpop.f32.mrf.mxu0
        %v642 = vadd.f32 %v602, %v641
        %643 = vmatmul.f32.gmra.mxu0 %v543
        %v644 = vpop.f32.mrf.mxu0
        %v645 = vadd.f32 %v602, %v644
        %646 = vmatmul.f32.gmra.mxu0 %v544
        %v647 = vpop.f32.mrf.mxu0
        %v648 = vadd.f32 %v602, %v647
        %649 = vmatmul.f32.gmra.mxu0 %v545
        %v650 = vpop.f32.mrf.mxu0
        %v651 = vadd.f32 %v602, %v650
        %652 = vmatmul.f32.gmra.mxu0 %v546
        %v653 = vpop.f32.mrf.mxu0
        %v654 = vadd.f32 %v602, %v653
        %655 = vmatmul.f32.gmra.mxu0 %v547
        %v656 = vpop.f32.mrf.mxu0
        %v657 = vadd.f32 %v602, %v656
        %658 = vmatmul.f32.gmra.mxu0 %v548
        %v659 = vpop.f32.mrf.mxu0
        %v660 = vadd.f32 %v602, %v659
        %661 = vmatmul.f32.gmra.mxu0 %v549
        %v662 = vpop.f32.mrf.mxu0
        %v663 = vadd.f32 %v602, %v662
        %664 = vmatmul.f32.gmra.mxu0 %v550
        %v665 = vpop.f32.mrf.mxu0
        %v666 = vadd.f32 %v602, %v665
        %667 = vmatmul.f32.gmra.mxu0 %v551
        %v668 = vpop.f32.mrf.mxu0
        %v669 = vadd.f32 %v602, %v668
        %670 = vmatmul.f32.gmra.mxu0 %v552
        %v671 = vpop.f32.mrf.mxu0
        %v672 = vadd.f32 %v602, %v671
        %673 = vmatmul.f32.gmra.mxu0 %v553
        %v674 = vpop.f32.mrf.mxu0
        %v675 = vadd.f32 %v602, %v674
        %676 = vmatmul.f32.gmra.mxu0 %v554
        %v677 = vpop.f32.mrf.mxu0
        %v678 = vadd.f32 %v602, %v677
        %679 = vmatmul.f32.gmra.mxu0 %v555
        %v680 = vpop.f32.mrf.mxu0
        %v681 = vadd.f32 %v602, %v680
        %682 = vmatmul.f32.gmra.mxu0 %v556
        %v683 = vpop.f32.mrf.mxu0
        %v684 = vadd.f32 %v602, %v683
        %685 = vmatmul.f32.gmra.mxu0 %v557
        %v686 = vpop.f32.mrf.mxu0
        %v687 = vadd.f32 %v602, %v686
        %688 = vmatmul.f32.gmra.mxu0 %v558
        %v689 = vpop.f32.mrf.mxu0
        %v690 = vadd.f32 %v602, %v689
        %691 = vmatmul.f32.gmra.mxu0 %v559
        %v692 = vpop.f32.mrf.mxu0
        %v693 = vadd.f32 %v602, %v692
        %694 = vmatmul.f32.gmra.mxu0 %v560
        %v695 = vpop.f32.mrf.mxu0
        %v696 = vadd.f32 %v602, %v695
        %697 = vmatmul.f32.gmra.mxu0 %v561
        %v698 = vpop.f32.mrf.mxu0
        %v699 = vadd.f32 %v602, %v698
        %700 = vmatmul.f32.gmra.mxu0 %v562
        %v701 = vpop.f32.mrf.mxu0
        %v702 = vadd.f32 %v602, %v701
        %703 = vmatmul.f32.gmra.mxu0 %v563
        %v704 = vpop.f32.mrf.mxu0
        %v705 = vadd.f32 %v602, %v704
        %706 = vmatmul.f32.gmra.mxu0 %v564
        %v707 = vpop.f32.mrf.mxu0
        %v708 = vadd.f32 %v602, %v707
        %709 = vmatmul.f32.gmra.mxu0 %v565
        %v710 = vpop.f32.mrf.mxu0
        %v711 = vadd.f32 %v602, %v710
        %712 = vmatmul.f32.gmra.mxu0 %v566
        %v713 = vpop.f32.mrf.mxu0
        %v714 = vadd.f32 %v602, %v713
        %715 = vmatmul.f32.gmra.mxu0 %v567
        %v716 = vpop.f32.mrf.mxu0
        %v717 = vadd.f32 %v602, %v716
        %718 = vdwg.mxu0
        %719 = vmatpush.msra.mxu0 %v599
        %720 = vmatpush.msra.mxu0 %v597
        %721 = vmatpush.msra.mxu0 %v595
        %722 = vmatpush.msra.mxu0 %v593
        %723 = vmatpush.msra.mxu0 %v591
        %724 = vmatpush.msra.mxu0 %v589
        %725 = vmatpush.msra.mxu0 %v587
        %726 = vmatpush.msra.mxu0 %v585
        %727 = vmatpush.msra.mxu0 %v583
        %728 = vmatpush.msra.mxu0 %v581
        %729 = vmatpush.msra.mxu0 %v579
        %730 = vmatpush.msra.mxu0 %v577
        %731 = vmatpush.msra.mxu0 %v575
        %732 = vmatpush.msra.mxu0 %v573
        %733 = vmatpush.msra.mxu0 %v571
        %734 = vmatpush.msra.mxu0 %v569
        %735 = vmatmul.f32.gmra.mxu0 %v536
        %v736 = vpop.f32.mrf.mxu0
        %v737 = vadd.f32 %v603, %v736
        %738 = vmatmul.f32.gmra.mxu0 %v537
        %v739 = vpop.f32.mrf.mxu0
        %v740 = vadd.f32 %v603, %v739
        %741 = vmatmul.f32.gmra.mxu0 %v538
        %v742 = vpop.f32.mrf.mxu0
        %v743 = vadd.f32 %v603, %v742
        %744 = vmatmul.f32.gmra.mxu0 %v539
        %v745 = vpop.f32.mrf.mxu0
        %v746 = vadd.f32 %v603, %v745
        %747 = vmatmul.f32.gmra.mxu0 %v540
        %v748 = vpop.f32.mrf.mxu0
        %v749 = vadd.f32 %v603, %v748
        %750 = vmatmul.f32.gmra.mxu0 %v541
        %v751 = vpop.f32.mrf.mxu0
        %v752 = vadd.f32 %v603, %v751
        %753 = vmatmul.f32.gmra.mxu0 %v542
        %v754 = vpop.f32.mrf.mxu0
        %v755 = vadd.f32 %v603, %v754
        %756 = vmatmul.f32.gmra.mxu0 %v543
        %v757 = vpop.f32.mrf.mxu0
        %v758 = vadd.f32 %v603, %v757
        %759 = vmatmul.f32.gmra.mxu0 %v544
        %v760 = vpop.f32.mrf.mxu0
        %v761 = vadd.f32 %v603, %v760
        %762 = vmatmul.f32.gmra.mxu0 %v545
        %v763 = vpop.f32.mrf.mxu0
        %v764 = vadd.f32 %v603, %v763
        %765 = vmatmul.f32.gmra.mxu0 %v546
        %v766 = vpop.f32.mrf.mxu0
        %v767 = vadd.f32 %v603, %v766
        %768 = vmatmul.f32.gmra.mxu0 %v547
        %v769 = vpop.f32.mrf.mxu0
        %v770 = vadd.f32 %v603, %v769
        %771 = vmatmul.f32.gmra.mxu0 %v548
        %v772 = vpop.f32.mrf.mxu0
        %v773 = vadd.f32 %v603, %v772
        %774 = vmatmul.f32.gmra.mxu0 %v549
        %v775 = vpop.f32.mrf.mxu0
        %v776 = vadd.f32 %v603, %v775
        %777 = vmatmul.f32.gmra.mxu0 %v550
        %v778 = vpop.f32.mrf.mxu0
        %v779 = vadd.f32 %v603, %v778
        %780 = vmatmul.f32.gmra.mxu0 %v551
        %v781 = vpop.f32.mrf.mxu0
        %v782 = vadd.f32 %v603, %v781
        %783 = vmatmul.f32.gmra.mxu0 %v552
        %v784 = vpop.f32.mrf.mxu0
        %v785 = vadd.f32 %v603, %v784
        %786 = vmatmul.f32.gmra.mxu0 %v553
        %v787 = vpop.f32.mrf.mxu0
        %v788 = vadd.f32 %v603, %v787
        %789 = vmatmul.f32.gmra.mxu0 %v554
        %v790 = vpop.f32.mrf.mxu0
        %v791 = vadd.f32 %v603, %v790
        %792 = vmatmul.f32.gmra.mxu0 %v555
        %v793 = vpop.f32.mrf.mxu0
        %v794 = vadd.f32 %v603, %v793
        %795 = vmatmul.f32.gmra.mxu0 %v556
        %v796 = vpop.f32.mrf.mxu0
        %v797 = vadd.f32 %v603, %v796
        %798 = vmatmul.f32.gmra.mxu0 %v557
        %v799 = vpop.f32.mrf.mxu0
        %v800 = vadd.f32 %v603, %v799
        %801 = vmatmul.f32.gmra.mxu0 %v558
        %v802 = vpop.f32.mrf.mxu0
        %v803 = vadd.f32 %v603, %v802
        %804 = vmatmul.f32.gmra.mxu0 %v559
        %v805 = vpop.f32.mrf.mxu0
        %v806 = vadd.f32 %v603, %v805
        %807 = vmatmul.f32.gmra.mxu0 %v560
        %v808 = vpop.f32.mrf.mxu0
        %v809 = vadd.f32 %v603, %v808
        %810 = vmatmul.f32.gmra.mxu0 %v561
        %v811 = vpop.f32.mrf.mxu0
        %v812 = vadd.f32 %v603, %v811
        %813 = vmatmul.f32.gmra.mxu0 %v562
        %v814 = vpop.f32.mrf.mxu0
        %v815 = vadd.f32 %v603, %v814
        %816 = vmatmul.f32.gmra.mxu0 %v563
        %v817 = vpop.f32.mrf.mxu0
        %v818 = vadd.f32 %v603, %v817
        %819 = vmatmul.f32.gmra.mxu0 %v564
        %v820 = vpop.f32.mrf.mxu0
        %v821 = vadd.f32 %v603, %v820
        %822 = vmatmul.f32.gmra.mxu0 %v565
        %v823 = vpop.f32.mrf.mxu0
        %v824 = vadd.f32 %v603, %v823
        %825 = vmatmul.f32.gmra.mxu0 %v566
        %v826 = vpop.f32.mrf.mxu0
        %v827 = vadd.f32 %v603, %v826
        %828 = vmatmul.f32.gmra.mxu0 %v567
        %v829 = vpop.f32.mrf.mxu0
        %v830 = vadd.f32 %v603, %v829
        %831 = vdwg.mxu0
        %832 = vst [vmem:[%s496] sm:$0xff] %v624
        %833 = vst [vmem:[%s496 + $0x8] sm:$0xff] %v737
        %834 = vst [vmem:[%s496 + $0x10] sm:$0xff] %v627
        %835 = vst [vmem:[%s496 + $0x18] sm:$0xff] %v740
        %836 = vst [vmem:[%s496 + $0x20] sm:$0xff] %v630
        %837 = vst [vmem:[%s496 + $0x28] sm:$0xff] %v743
        %838 = vst [vmem:[%s496 + $0x30] sm:$0xff] %v633
        %839 = vst [vmem:[%s496 + $0x38] sm:$0xff] %v746
        %840 = vst [vmem:[%s496 + $0x40] sm:$0xff] %v636
        %841 = vst [vmem:[%s496 + $0x48] sm:$0xff] %v749
        %842 = vst [vmem:[%s496 + $0x50] sm:$0xff] %v639
        %843 = vst [vmem:[%s496 + $0x58] sm:$0xff] %v752
        %844 = vst [vmem:[%s496 + $0x60] sm:$0xff] %v642
        %845 = vst [vmem:[%s496 + $0x68] sm:$0xff] %v755
        %846 = vst [vmem:[%s496 + $0x70] sm:$0xff] %v645
        %847 = vst [vmem:[%s496 + $0x78] sm:$0xff] %v758
        %848 = vst [vmem:[%s496 + $0x80] sm:$0xff] %v648
        %849 = vst [vmem:[%s496 + $0x88] sm:$0xff] %v761
        %850 = vst [vmem:[%s496 + $0x90] sm:$0xff] %v651
        %851 = vst [vmem:[%s496 + $0x98] sm:$0xff] %v764
        %852 = vst [vmem:[%s496 + $0xa0] sm:$0xff] %v654
        %853 = vst [vmem:[%s496 + $0xa8] sm:$0xff] %v767
        %854 = vst [vmem:[%s496 + $0xb0] sm:$0xff] %v657
        %855 = vst [vmem:[%s496 + $0xb8] sm:$0xff] %v770
        %856 = vst [vmem:[%s496 + $0xc0] sm:$0xff] %v660
        %857 = vst [vmem:[%s496 + $0xc8] sm:$0xff] %v773
        %858 = vst [vmem:[%s496 + $0xd0] sm:$0xff] %v663
        %859 = vst [vmem:[%s496 + $0xd8] sm:$0xff] %v776
        %860 = vst [vmem:[%s496 + $0xe0] sm:$0xff] %v666
        %861 = vst [vmem:[%s496 + $0xe8] sm:$0xff] %v779
        %862 = vst [vmem:[%s496 + $0xf0] sm:$0xff] %v669
        %863 = vst [vmem:[%s496 + $0xf8] sm:$0xff] %v782
        %864 = vst [vmem:[%s496 + $0x100] sm:$0xff] %v672
        %865 = vst [vmem:[%s496 + $0x108] sm:$0xff] %v785
        %866 = vst [vmem:[%s496 + $0x110] sm:$0xff] %v675
        %867 = vst [vmem:[%s496 + $0x118] sm:$0xff] %v788
        %868 = vst [vmem:[%s496 + $0x120] sm:$0xff] %v678
        %869 = vst [vmem:[%s496 + $0x128] sm:$0xff] %v791
        %870 = vst [vmem:[%s496 + $0x130] sm:$0xff] %v681
        %871 = vst [vmem:[%s496 + $0x138] sm:$0xff] %v794
        %872 = vst [vmem:[%s496 + $0x140] sm:$0xff] %v684
        %873 = vst [vmem:[%s496 + $0x148] sm:$0xff] %v797
        %874 = vst [vmem:[%s496 + $0x150] sm:$0xff] %v687
        %875 = vst [vmem:[%s496 + $0x158] sm:$0xff] %v800
        %876 = vst [vmem:[%s496 + $0x160] sm:$0xff] %v690
        %877 = vst [vmem:[%s496 + $0x168] sm:$0xff] %v803
        %878 = vst [vmem:[%s496 + $0x170] sm:$0xff] %v693
        %879 = vst [vmem:[%s496 + $0x178] sm:$0xff] %v806
        %880 = vst [vmem:[%s496 + $0x180] sm:$0xff] %v696
        %881 = vst [vmem:[%s496 + $0x188] sm:$0xff] %v809
        %882 = vst [vmem:[%s496 + $0x190] sm:$0xff] %v699
        %883 = vst [vmem:[%s496 + $0x198] sm:$0xff] %v812
        %884 = vst [vmem:[%s496 + $0x1a0] sm:$0xff] %v702
        %885 = vst [vmem:[%s496 + $0x1a8] sm:$0xff] %v815
        %886 = vst [vmem:[%s496 + $0x1b0] sm:$0xff] %v705
        %887 = vst [vmem:[%s496 + $0x1b8] sm:$0xff] %v818
        %888 = vst [vmem:[%s496 + $0x1c0] sm:$0xff] %v708
        %889 = vst [vmem:[%s496 + $0x1c8] sm:$0xff] %v821
        %890 = vst [vmem:[%s496 + $0x1d0] sm:$0xff] %v711
        %891 = vst [vmem:[%s496 + $0x1d8] sm:$0xff] %v824
        %892 = vst [vmem:[%s496 + $0x1e0] sm:$0xff] %v714
        %893 = vst [vmem:[%s496 + $0x1e8] sm:$0xff] %v827
        %894 = vst [vmem:[%s496 + $0x1f0] sm:$0xff] %v717
        %895 = vst [vmem:[%s496 + $0x1f8] sm:$0xff] %v830
        %v896 = vld [vmem:[%s518] sm:$0xff]
        %v897 = vld [vmem:[%s518 + $0x8] sm:$0xff]
        %v898 = vld [vmem:[%s518 + $0x10] sm:$0xff]
        %v899 = vld [vmem:[%s518 + $0x18] sm:$0xff]
        %v900 = vld [vmem:[%s518 + $0x20] sm:$0xff]
        %v901 = vld [vmem:[%s518 + $0x28] sm:$0xff]
        %v902 = vld [vmem:[%s518 + $0x30] sm:$0xff]
        %v903 = vld [vmem:[%s518 + $0x38] sm:$0xff]
        %v904 = vld [vmem:[%s518 + $0x40] sm:$0xff]
        %v905 = vld [vmem:[%s518 + $0x48] sm:$0xff]
        %v906 = vld [vmem:[%s518 + $0x50] sm:$0xff]
        %v907 = vld [vmem:[%s518 + $0x58] sm:$0xff]
        %v908 = vld [vmem:[%s518 + $0x60] sm:$0xff]
        %v909 = vld [vmem:[%s518 + $0x68] sm:$0xff]
        %v910 = vld [vmem:[%s518 + $0x70] sm:$0xff]
        %v911 = vld [vmem:[%s518 + $0x78] sm:$0xff]
        %v912 = vld [vmem:[#allocation7] sm:$0xff]
        %v913 = vld [vmem:[#allocation7 + $0x8] sm:$0xff]
        %v914 = vld [vmem:[#allocation7 + $0x10] sm:$0xff]
        %v915 = vld [vmem:[#allocation7 + $0x18] sm:$0xff]
        %v916 = vld [vmem:[#allocation7 + $0x20] sm:$0xff]
        %v917 = vld [vmem:[#allocation7 + $0x28] sm:$0xff]
        %v918 = vld [vmem:[#allocation7 + $0x30] sm:$0xff]
        %v919 = vld [vmem:[#allocation7 + $0x38] sm:$0xff]
        %v920 = vld [vmem:[#allocation7 + $0x40] sm:$0xff]
        %v921 = vld [vmem:[#allocation7 + $0x48] sm:$0xff]
        %v922 = vld [vmem:[#allocation7 + $0x50] sm:$0xff]
        %v923 = vld [vmem:[#allocation7 + $0x58] sm:$0xff]
        %v924 = vld [vmem:[#allocation7 + $0x60] sm:$0xff]
        %v925 = vld [vmem:[#allocation7 + $0x68] sm:$0xff]
        %v926 = vld [vmem:[#allocation7 + $0x70] sm:$0xff]
        %v927 = vld [vmem:[#allocation7 + $0x78] sm:$0xff]
        %v928 = vld [vmem:[#allocation7 + $0x80] sm:$0xff]
        %v929 = vld [vmem:[#allocation7 + $0x88] sm:$0xff]
        %v930 = vld [vmem:[#allocation7 + $0x90] sm:$0xff]
        %v931 = vld [vmem:[#allocation7 + $0x98] sm:$0xff]
        %v932 = vld [vmem:[#allocation7 + $0xa0] sm:$0xff]
        %v933 = vld [vmem:[#allocation7 + $0xa8] sm:$0xff]
        %v934 = vld [vmem:[#allocation7 + $0xb0] sm:$0xff]
        %v935 = vld [vmem:[#allocation7 + $0xb8] sm:$0xff]
        %v936 = vld [vmem:[#allocation7 + $0xc0] sm:$0xff]
        %v937 = vld [vmem:[#allocation7 + $0xc8] sm:$0xff]
        %v938 = vld [vmem:[#allocation7 + $0xd0] sm:$0xff]
        %v939 = vld [vmem:[#allocation7 + $0xd8] sm:$0xff]
        %v940 = vld [vmem:[#allocation7 + $0xe0] sm:$0xff]
        %v941 = vld [vmem:[#allocation7 + $0xe8] sm:$0xff]
        %v942 = vld [vmem:[#allocation7 + $0xf0] sm:$0xff]
        %v943 = vld [vmem:[#allocation7 + $0xf8] sm:$0xff]
        %v944 = vld [vmem:[#allocation7 + $0x100] sm:$0xff]
        %v945 = vld [vmem:[#allocation7 + $0x108] sm:$0xff]
        %v946 = vld [vmem:[#allocation7 + $0x110] sm:$0xff]
        %v947 = vld [vmem:[#allocation7 + $0x118] sm:$0xff]
        %v948 = vld [vmem:[#allocation7 + $0x120] sm:$0xff]
        %v949 = vld [vmem:[#allocation7 + $0x128] sm:$0xff]
        %v950 = vld [vmem:[#allocation7 + $0x130] sm:$0xff]
        %v951 = vld [vmem:[#allocation7 + $0x138] sm:$0xff]
        %v952 = vld [vmem:[#allocation7 + $0x140] sm:$0xff]
        %v953 = vld [vmem:[#allocation7 + $0x148] sm:$0xff]
        %v954 = vld [vmem:[#allocation7 + $0x150] sm:$0xff]
        %v955 = vld [vmem:[#allocation7 + $0x158] sm:$0xff]
        %v956 = vld [vmem:[#allocation7 + $0x160] sm:$0xff]
        %v957 = vld [vmem:[#allocation7 + $0x168] sm:$0xff]
        %v958 = vld [vmem:[#allocation7 + $0x170] sm:$0xff]
        %v959 = vld [vmem:[#allocation7 + $0x178] sm:$0xff]
        %v960 = vld [vmem:[#allocation7 + $0x180] sm:$0xff]
        %v961 = vld [vmem:[#allocation7 + $0x188] sm:$0xff]
        %v962 = vld [vmem:[#allocation7 + $0x190] sm:$0xff]
        %v963 = vld [vmem:[#allocation7 + $0x198] sm:$0xff]
        %v964 = vld [vmem:[#allocation7 + $0x1a0] sm:$0xff]
        %v965 = vld [vmem:[#allocation7 + $0x1a8] sm:$0xff]
        %v966 = vld [vmem:[#allocation7 + $0x1b0] sm:$0xff]
        %v967 = vld [vmem:[#allocation7 + $0x1b8] sm:$0xff]
        %v968 = vld [vmem:[#allocation7 + $0x1c0] sm:$0xff]
        %v969 = vld [vmem:[#allocation7 + $0x1c8] sm:$0xff]
        %v970 = vld [vmem:[#allocation7 + $0x1d0] sm:$0xff]
        %v971 = vld [vmem:[#allocation7 + $0x1d8] sm:$0xff]
        %v972 = vld [vmem:[#allocation7 + $0x1e0] sm:$0xff]
        %v973 = vld [vmem:[#allocation7 + $0x1e8] sm:$0xff]
        %v974 = vld [vmem:[#allocation7 + $0x1f0] sm:$0xff]
        %v975 = vld [vmem:[#allocation7 + $0x1f8] sm:$0xff]
        %v976 = vld [vmem:[%s7] sm:$0x3]
        %v978 = vperm.slane %v976, 0
        %v979 = vperm.slane %v976, 1
        %982 = vmatpush.msra.mxu0 %v942
        %983 = vmatpush.msra.mxu0 %v940
        %984 = vmatpush.msra.mxu0 %v938
        %985 = vmatpush.msra.mxu0 %v936
        %986 = vmatpush.msra.mxu0 %v934
        %987 = vmatpush.msra.mxu0 %v932
        %988 = vmatpush.msra.mxu0 %v930
        %989 = vmatpush.msra.mxu0 %v928
        %990 = vmatpush.msra.mxu0 %v926
        %991 = vmatpush.msra.mxu0 %v924
        %992 = vmatpush.msra.mxu0 %v922
        %993 = vmatpush.msra.mxu0 %v920
        %994 = vmatpush.msra.mxu0 %v918
        %995 = vmatpush.msra.mxu0 %v916
        %996 = vmatpush.msra.mxu0 %v914
        %997 = vmatpush.msra.mxu0 %v912
        %998 = vmatmul.f32.gmra.mxu0 %v896
        %v999 = vpop.f32.mrf.mxu0
        %v1000 = vadd.f32 %v978, %v999
        %1001 = vmatmul.f32.gmra.mxu0 %v898
        %v1002 = vpop.f32.mrf.mxu0
        %v1003 = vadd.f32 %v978, %v1002
        %1004 = vmatmul.f32.gmra.mxu0 %v900
        %v1005 = vpop.f32.mrf.mxu0
        %v1006 = vadd.f32 %v978, %v1005
        %1007 = vmatmul.f32.gmra.mxu0 %v902
        %v1008 = vpop.f32.mrf.mxu0
        %v1009 = vadd.f32 %v978, %v1008
        %1010 = vmatmul.f32.gmra.mxu0 %v904
        %v1011 = vpop.f32.mrf.mxu0
        %v1012 = vadd.f32 %v978, %v1011
        %1013 = vmatmul.f32.gmra.mxu0 %v906
        %v1014 = vpop.f32.mrf.mxu0
        %v1015 = vadd.f32 %v978, %v1014
        %1016 = vmatmul.f32.gmra.mxu0 %v908
        %v1017 = vpop.f32.mrf.mxu0
        %v1018 = vadd.f32 %v978, %v1017
        %1019 = vmatmul.f32.gmra.mxu0 %v910
        %v1020 = vpop.f32.mrf.mxu0
        %v1021 = vadd.f32 %v978, %v1020
        %1022 = vdwg.mxu0
        %1023 = vmatpush.msra.mxu0 %v974
        %1024 = vmatpush.msra.mxu0 %v972
        %1025 = vmatpush.msra.mxu0 %v970
        %1026 = vmatpush.msra.mxu0 %v968
        %1027 = vmatpush.msra.mxu0 %v966
        %1028 = vmatpush.msra.mxu0 %v964
        %1029 = vmatpush.msra.mxu0 %v962
        %1030 = vmatpush.msra.mxu0 %v960
        %1031 = vmatpush.msra.mxu0 %v958
        %1032 = vmatpush.msra.mxu0 %v956
        %1033 = vmatpush.msra.mxu0 %v954
        %1034 = vmatpush.msra.mxu0 %v952
        %1035 = vmatpush.msra.mxu0 %v950
        %1036 = vmatpush.msra.mxu0 %v948
        %1037 = vmatpush.msra.mxu0 %v946
        %1038 = vmatpush.msra.mxu0 %v944
        %1039 = vmatmul.f32.gmra.mxu0 %v897
        %v1040 = vpop.f32.mrf.mxu0
        %v1041 = vadd.f32 %v1000, %v1040
        %1042 = vmatmul.f32.gmra.mxu0 %v899
        %v1043 = vpop.f32.mrf.mxu0
        %v1044 = vadd.f32 %v1003, %v1043
        %1045 = vmatmul.f32.gmra.mxu0 %v901
        %v1046 = vpop.f32.mrf.mxu0
        %v1047 = vadd.f32 %v1006, %v1046
        %1048 = vmatmul.f32.gmra.mxu0 %v903
        %v1049 = vpop.f32.mrf.mxu0
        %v1050 = vadd.f32 %v1009, %v1049
        %1051 = vmatmul.f32.gmra.mxu0 %v905
        %v1052 = vpop.f32.mrf.mxu0
        %v1053 = vadd.f32 %v1012, %v1052
        %1054 = vmatmul.f32.gmra.mxu0 %v907
        %v1055 = vpop.f32.mrf.mxu0
        %v1056 = vadd.f32 %v1015, %v1055
        %1057 = vmatmul.f32.gmra.mxu0 %v909
        %v1058 = vpop.f32.mrf.mxu0
        %v1059 = vadd.f32 %v1018, %v1058
        %1060 = vmatmul.f32.gmra.mxu0 %v911
        %v1061 = vpop.f32.mrf.mxu0
        %v1062 = vadd.f32 %v1021, %v1061
        %1063 = vdwg.mxu0
        %1064 = vmatpush.msra.mxu0 %v943
        %1065 = vmatpush.msra.mxu0 %v941
        %1066 = vmatpush.msra.mxu0 %v939
        %1067 = vmatpush.msra.mxu0 %v937
        %1068 = vmatpush.msra.mxu0 %v935
        %1069 = vmatpush.msra.mxu0 %v933
        %1070 = vmatpush.msra.mxu0 %v931
        %1071 = vmatpush.msra.mxu0 %v929
        %1072 = vmatpush.msra.mxu0 %v927
        %1073 = vmatpush.msra.mxu0 %v925
        %1074 = vmatpush.msra.mxu0 %v923
        %1075 = vmatpush.msra.mxu0 %v921
        %1076 = vmatpush.msra.mxu0 %v919
        %1077 = vmatpush.msra.mxu0 %v917
        %1078 = vmatpush.msra.mxu0 %v915
        %1079 = vmatpush.msra.mxu0 %v913
        %1080 = vmatmul.f32.gmra.mxu0 %v896
        %v1081 = vpop.f32.mrf.mxu0
        %v1082 = vadd.f32 %v979, %v1081
        %1083 = vmatmul.f32.gmra.mxu0 %v898
        %v1084 = vpop.f32.mrf.mxu0
        %v1085 = vadd.f32 %v979, %v1084
        %1086 = vmatmul.f32.gmra.mxu0 %v900
        %v1087 = vpop.f32.mrf.mxu0
        %v1088 = vadd.f32 %v979, %v1087
        %1089 = vmatmul.f32.gmra.mxu0 %v902
        %v1090 = vpop.f32.mrf.mxu0
        %v1091 = vadd.f32 %v979, %v1090
        %1092 = vmatmul.f32.gmra.mxu0 %v904
        %v1093 = vpop.f32.mrf.mxu0
        %v1094 = vadd.f32 %v979, %v1093
        %1095 = vmatmul.f32.gmra.mxu0 %v906
        %v1096 = vpop.f32.mrf.mxu0
        %v1097 = vadd.f32 %v979, %v1096
        %1098 = vmatmul.f32.gmra.mxu0 %v908
        %v1099 = vpop.f32.mrf.mxu0
        %v1100 = vadd.f32 %v979, %v1099
        %1101 = vmatmul.f32.gmra.mxu0 %v910
        %v1102 = vpop.f32.mrf.mxu0
        %v1103 = vadd.f32 %v979, %v1102
        %1104 = vdwg.mxu0
        %1105 = vmatpush.msra.mxu0 %v975
        %1106 = vmatpush.msra.mxu0 %v973
        %1107 = vmatpush.msra.mxu0 %v971
        %1108 = vmatpush.msra.mxu0 %v969
        %1109 = vmatpush.msra.mxu0 %v967
        %1110 = vmatpush.msra.mxu0 %v965
        %1111 = vmatpush.msra.mxu0 %v963
        %1112 = vmatpush.msra.mxu0 %v961
        %1113 = vmatpush.msra.mxu0 %v959
        %1114 = vmatpush.msra.mxu0 %v957
        %1115 = vmatpush.msra.mxu0 %v955
        %1116 = vmatpush.msra.mxu0 %v953
        %1117 = vmatpush.msra.mxu0 %v951
        %1118 = vmatpush.msra.mxu0 %v949
        %1119 = vmatpush.msra.mxu0 %v947
        %1120 = vmatpush.msra.mxu0 %v945
        %1121 = vmatmul.f32.gmra.mxu0 %v897
        %v1122 = vpop.f32.mrf.mxu0
        %v1123 = vadd.f32 %v1082, %v1122
        %1124 = vmatmul.f32.gmra.mxu0 %v899
        %v1125 = vpop.f32.mrf.mxu0
        %v1126 = vadd.f32 %v1085, %v1125
        %1127 = vmatmul.f32.gmra.mxu0 %v901
        %v1128 = vpop.f32.mrf.mxu0
        %v1129 = vadd.f32 %v1088, %v1128
        %1130 = vmatmul.f32.gmra.mxu0 %v903
        %v1131 = vpop.f32.mrf.mxu0
        %v1132 = vadd.f32 %v1091, %v1131
        %1133 = vmatmul.f32.gmra.mxu0 %v905
        %v1134 = vpop.f32.mrf.mxu0
        %v1135 = vadd.f32 %v1094, %v1134
        %1136 = vmatmul.f32.gmra.mxu0 %v907
        %v1137 = vpop.f32.mrf.mxu0
        %v1138 = vadd.f32 %v1097, %v1137
        %1139 = vmatmul.f32.gmra.mxu0 %v909
        %v1140 = vpop.f32.mrf.mxu0
        %v1141 = vadd.f32 %v1100, %v1140
        %1142 = vmatmul.f32.gmra.mxu0 %v911
        %v1143 = vpop.f32.mrf.mxu0
        %v1144 = vadd.f32 %v1103, %v1143
        %1145 = vdwg.mxu0
        %1146 = vst [vmem:[%s503] sm:$0xff] %v1041
        %1147 = vst [vmem:[%s503 + $0x8] sm:$0xff] %v1123
        %1148 = vst [vmem:[%s503 + $0x10] sm:$0xff] %v1044
        %1149 = vst [vmem:[%s503 + $0x18] sm:$0xff] %v1126
        %1150 = vst [vmem:[%s503 + $0x20] sm:$0xff] %v1047
        %1151 = vst [vmem:[%s503 + $0x28] sm:$0xff] %v1129
        %1152 = vst [vmem:[%s503 + $0x30] sm:$0xff] %v1050
        %1153 = vst [vmem:[%s503 + $0x38] sm:$0xff] %v1132
        %1154 = vst [vmem:[%s503 + $0x40] sm:$0xff] %v1053
        %1155 = vst [vmem:[%s503 + $0x48] sm:$0xff] %v1135
        %1156 = vst [vmem:[%s503 + $0x50] sm:$0xff] %v1056
        %1157 = vst [vmem:[%s503 + $0x58] sm:$0xff] %v1138
        %1158 = vst [vmem:[%s503 + $0x60] sm:$0xff] %v1059
        %1159 = vst [vmem:[%s503 + $0x68] sm:$0xff] %v1141
        %1160 = vst [vmem:[%s503 + $0x70] sm:$0xff] %v1062
        %1161 = vst [vmem:[%s503 + $0x78] sm:$0xff] %v1144
        %v1162 = vld [vmem:[%s525] sm:$0xff]
        %v1163 = vld [vmem:[%s525 + $0x8] sm:$0xff]
        %v1164 = vld [vmem:[%s525 + $0x10] sm:$0xff]
        %v1165 = vld [vmem:[%s525 + $0x18] sm:$0xff]
        %v1166 = vld [vmem:[%s525 + $0x20] sm:$0xff]
        %v1167 = vld [vmem:[%s525 + $0x28] sm:$0xff]
        %v1168 = vld [vmem:[%s525 + $0x30] sm:$0xff]
        %v1169 = vld [vmem:[%s525 + $0x38] sm:$0xff]
        %v1170 = vld [vmem:[#allocation8] sm:$0xff]
        %v1171 = vld [vmem:[#allocation8 + $0x8] sm:$0xff]
        %v1172 = vld [vmem:[#allocation8 + $0x10] sm:$0xff]
        %v1173 = vld [vmem:[#allocation8 + $0x18] sm:$0xff]
        %v1174 = vld [vmem:[#allocation8 + $0x20] sm:$0xff]
        %v1175 = vld [vmem:[#allocation8 + $0x28] sm:$0xff]
        %v1176 = vld [vmem:[#allocation8 + $0x30] sm:$0xff]
        %v1177 = vld [vmem:[#allocation8 + $0x38] sm:$0xff]
        %v1178 = vld [vmem:[#allocation8 + $0x40] sm:$0xff]
        %v1179 = vld [vmem:[#allocation8 + $0x48] sm:$0xff]
        %v1180 = vld [vmem:[#allocation8 + $0x50] sm:$0xff]
        %v1181 = vld [vmem:[#allocation8 + $0x58] sm:$0xff]
        %v1182 = vld [vmem:[#allocation8 + $0x60] sm:$0xff]
        %v1183 = vld [vmem:[#allocation8 + $0x68] sm:$0xff]
        %v1184 = vld [vmem:[#allocation8 + $0x70] sm:$0xff]
        %v1185 = vld [vmem:[#allocation8 + $0x78] sm:$0xff]
        %v1186 = vld [vmem:[#allocation8 + $0x80] sm:$0xff]
        %v1187 = vld [vmem:[#allocation8 + $0x88] sm:$0xff]
        %v1188 = vld [vmem:[#allocation8 + $0x90] sm:$0xff]
        %v1189 = vld [vmem:[#allocation8 + $0x98] sm:$0xff]
        %v1190 = vld [vmem:[#allocation8 + $0xa0] sm:$0xff]
        %v1191 = vld [vmem:[#allocation8 + $0xa8] sm:$0xff]
        %v1192 = vld [vmem:[#allocation8 + $0xb0] sm:$0xff]
        %v1193 = vld [vmem:[#allocation8 + $0xb8] sm:$0xff]
        %v1194 = vld [vmem:[#allocation8 + $0xc0] sm:$0xff]
        %v1195 = vld [vmem:[#allocation8 + $0xc8] sm:$0xff]
        %v1196 = vld [vmem:[#allocation8 + $0xd0] sm:$0xff]
        %v1197 = vld [vmem:[#allocation8 + $0xd8] sm:$0xff]
        %v1198 = vld [vmem:[#allocation8 + $0xe0] sm:$0xff]
        %v1199 = vld [vmem:[#allocation8 + $0xe8] sm:$0xff]
        %v1200 = vld [vmem:[#allocation8 + $0xf0] sm:$0xff]
        %v1201 = vld [vmem:[#allocation8 + $0xf8] sm:$0xff]
        %v1202 = vld [vmem:[#allocation8 + $0x100] sm:$0xff]
        %v1203 = vld [vmem:[#allocation8 + $0x108] sm:$0xff]
        %v1204 = vld [vmem:[#allocation8 + $0x110] sm:$0xff]
        %v1205 = vld [vmem:[#allocation8 + $0x118] sm:$0xff]
        %v1206 = vld [vmem:[#allocation8 + $0x120] sm:$0xff]
        %v1207 = vld [vmem:[#allocation8 + $0x128] sm:$0xff]
        %v1208 = vld [vmem:[#allocation8 + $0x130] sm:$0xff]
        %v1209 = vld [vmem:[#allocation8 + $0x138] sm:$0xff]
        %v1210 = vld [vmem:[#allocation8 + $0x140] sm:$0xff]
        %v1211 = vld [vmem:[#allocation8 + $0x148] sm:$0xff]
        %v1212 = vld [vmem:[#allocation8 + $0x150] sm:$0xff]
        %v1213 = vld [vmem:[#allocation8 + $0x158] sm:$0xff]
        %v1214 = vld [vmem:[#allocation8 + $0x160] sm:$0xff]
        %v1215 = vld [vmem:[#allocation8 + $0x168] sm:$0xff]
        %v1216 = vld [vmem:[#allocation8 + $0x170] sm:$0xff]
        %v1217 = vld [vmem:[#allocation8 + $0x178] sm:$0xff]
        %v1218 = vld [vmem:[#allocation8 + $0x180] sm:$0xff]
        %v1219 = vld [vmem:[#allocation8 + $0x188] sm:$0xff]
        %v1220 = vld [vmem:[#allocation8 + $0x190] sm:$0xff]
        %v1221 = vld [vmem:[#allocation8 + $0x198] sm:$0xff]
        %v1222 = vld [vmem:[#allocation8 + $0x1a0] sm:$0xff]
        %v1223 = vld [vmem:[#allocation8 + $0x1a8] sm:$0xff]
        %v1224 = vld [vmem:[#allocation8 + $0x1b0] sm:$0xff]
        %v1225 = vld [vmem:[#allocation8 + $0x1b8] sm:$0xff]
        %v1226 = vld [vmem:[#allocation8 + $0x1c0] sm:$0xff]
        %v1227 = vld [vmem:[#allocation8 + $0x1c8] sm:$0xff]
        %v1228 = vld [vmem:[#allocation8 + $0x1d0] sm:$0xff]
        %v1229 = vld [vmem:[#allocation8 + $0x1d8] sm:$0xff]
        %v1230 = vld [vmem:[#allocation8 + $0x1e0] sm:$0xff]
        %v1231 = vld [vmem:[#allocation8 + $0x1e8] sm:$0xff]
        %v1232 = vld [vmem:[#allocation8 + $0x1f0] sm:$0xff]
        %v1233 = vld [vmem:[#allocation8 + $0x1f8] sm:$0xff]
        %v1234 = vld [vmem:[#allocation8 + $0x200] sm:$0xff]
        %v1235 = vld [vmem:[#allocation8 + $0x208] sm:$0xff]
        %v1236 = vld [vmem:[#allocation8 + $0x210] sm:$0xff]
        %v1237 = vld [vmem:[#allocation8 + $0x218] sm:$0xff]
        %v1238 = vld [vmem:[#allocation8 + $0x220] sm:$0xff]
        %v1239 = vld [vmem:[#allocation8 + $0x228] sm:$0xff]
        %v1240 = vld [vmem:[#allocation8 + $0x230] sm:$0xff]
        %v1241 = vld [vmem:[#allocation8 + $0x238] sm:$0xff]
        %v1242 = vld [vmem:[#allocation8 + $0x240] sm:$0xff]
        %v1243 = vld [vmem:[#allocation8 + $0x248] sm:$0xff]
        %v1244 = vld [vmem:[#allocation8 + $0x250] sm:$0xff]
        %v1245 = vld [vmem:[#allocation8 + $0x258] sm:$0xff]
        %v1246 = vld [vmem:[#allocation8 + $0x260] sm:$0xff]
        %v1247 = vld [vmem:[#allocation8 + $0x268] sm:$0xff]
        %v1248 = vld [vmem:[#allocation8 + $0x270] sm:$0xff]
        %v1249 = vld [vmem:[#allocation8 + $0x278] sm:$0xff]
        %v1250 = vld [vmem:[#allocation8 + $0x280] sm:$0xff]
        %v1251 = vld [vmem:[#allocation8 + $0x288] sm:$0xff]
        %v1252 = vld [vmem:[#allocation8 + $0x290] sm:$0xff]
        %v1253 = vld [vmem:[#allocation8 + $0x298] sm:$0xff]
        %v1254 = vld [vmem:[#allocation8 + $0x2a0] sm:$0xff]
        %v1255 = vld [vmem:[#allocation8 + $0x2a8] sm:$0xff]
        %v1256 = vld [vmem:[#allocation8 + $0x2b0] sm:$0xff]
        %v1257 = vld [vmem:[#allocation8 + $0x2b8] sm:$0xff]
        %v1258 = vld [vmem:[#allocation8 + $0x2c0] sm:$0xff]
        %v1259 = vld [vmem:[#allocation8 + $0x2c8] sm:$0xff]
        %v1260 = vld [vmem:[#allocation8 + $0x2d0] sm:$0xff]
        %v1261 = vld [vmem:[#allocation8 + $0x2d8] sm:$0xff]
        %v1262 = vld [vmem:[#allocation8 + $0x2e0] sm:$0xff]
        %v1263 = vld [vmem:[#allocation8 + $0x2e8] sm:$0xff]
        %v1264 = vld [vmem:[#allocation8 + $0x2f0] sm:$0xff]
        %v1265 = vld [vmem:[#allocation8 + $0x2f8] sm:$0xff]
        %v1266 = vld [vmem:[#allocation8 + $0x300] sm:$0xff]
        %v1267 = vld [vmem:[#allocation8 + $0x308] sm:$0xff]
        %v1268 = vld [vmem:[#allocation8 + $0x310] sm:$0xff]
        %v1269 = vld [vmem:[#allocation8 + $0x318] sm:$0xff]
        %v1270 = vld [vmem:[#allocation8 + $0x320] sm:$0xff]
        %v1271 = vld [vmem:[#allocation8 + $0x328] sm:$0xff]
        %v1272 = vld [vmem:[#allocation8 + $0x330] sm:$0xff]
        %v1273 = vld [vmem:[#allocation8 + $0x338] sm:$0xff]
        %v1274 = vld [vmem:[#allocation8 + $0x340] sm:$0xff]
        %v1275 = vld [vmem:[#allocation8 + $0x348] sm:$0xff]
        %v1276 = vld [vmem:[#allocation8 + $0x350] sm:$0xff]
        %v1277 = vld [vmem:[#allocation8 + $0x358] sm:$0xff]
        %v1278 = vld [vmem:[#allocation8 + $0x360] sm:$0xff]
        %v1279 = vld [vmem:[#allocation8 + $0x368] sm:$0xff]
        %v1280 = vld [vmem:[#allocation8 + $0x370] sm:$0xff]
        %v1281 = vld [vmem:[#allocation8 + $0x378] sm:$0xff]
        %v1282 = vld [vmem:[#allocation8 + $0x380] sm:$0xff]
        %v1283 = vld [vmem:[#allocation8 + $0x388] sm:$0xff]
        %v1284 = vld [vmem:[#allocation8 + $0x390] sm:$0xff]
        %v1285 = vld [vmem:[#allocation8 + $0x398] sm:$0xff]
        %v1286 = vld [vmem:[#allocation8 + $0x3a0] sm:$0xff]
        %v1287 = vld [vmem:[#allocation8 + $0x3a8] sm:$0xff]
        %v1288 = vld [vmem:[#allocation8 + $0x3b0] sm:$0xff]
        %v1289 = vld [vmem:[#allocation8 + $0x3b8] sm:$0xff]
        %v1290 = vld [vmem:[#allocation8 + $0x3c0] sm:$0xff]
        %v1291 = vld [vmem:[#allocation8 + $0x3c8] sm:$0xff]
        %v1292 = vld [vmem:[#allocation8 + $0x3d0] sm:$0xff]
        %v1293 = vld [vmem:[#allocation8 + $0x3d8] sm:$0xff]
        %v1294 = vld [vmem:[#allocation8 + $0x3e0] sm:$0xff]
        %v1295 = vld [vmem:[#allocation8 + $0x3e8] sm:$0xff]
        %v1296 = vld [vmem:[#allocation8 + $0x3f0] sm:$0xff]
        %v1297 = vld [vmem:[#allocation8 + $0x3f8] sm:$0xff]
        %v1298 = vld [vmem:[%s8] sm:$0x3]
        %v1300 = vperm.slane %v1298, 0
        %v1301 = vperm.slane %v1298, 1
        %1304 = vmatpush.msra.mxu0 %v1200
        %1305 = vmatpush.msra.mxu0 %v1198
        %1306 = vmatpush.msra.mxu0 %v1196
        %1307 = vmatpush.msra.mxu0 %v1194
        %1308 = vmatpush.msra.mxu0 %v1192
        %1309 = vmatpush.msra.mxu0 %v1190
        %1310 = vmatpush.msra.mxu0 %v1188
        %1311 = vmatpush.msra.mxu0 %v1186
        %1312 = vmatpush.msra.mxu0 %v1184
        %1313 = vmatpush.msra.mxu0 %v1182
        %1314 = vmatpush.msra.mxu0 %v1180
        %1315 = vmatpush.msra.mxu0 %v1178
        %1316 = vmatpush.msra.mxu0 %v1176
        %1317 = vmatpush.msra.mxu0 %v1174
        %1318 = vmatpush.msra.mxu0 %v1172
        %1319 = vmatpush.msra.mxu0 %v1170
        %1320 = vmatmul.f32.gmra.mxu0 %v1162
        %v1321 = vpop.f32.mrf.mxu0
        %v1322 = vadd.f32 %v1300, %v1321
        %1323 = vmatmul.f32.gmra.mxu0 %v1166
        %v1324 = vpop.f32.mrf.mxu0
        %v1325 = vadd.f32 %v1300, %v1324
        %1326 = vdwg.mxu0
        %1327 = vmatpush.msra.mxu0 %v1232
        %1328 = vmatpush.msra.mxu0 %v1230
        %1329 = vmatpush.msra.mxu0 %v1228
        %1330 = vmatpush.msra.mxu0 %v1226
        %1331 = vmatpush.msra.mxu0 %v1224
        %1332 = vmatpush.msra.mxu0 %v1222
        %1333 = vmatpush.msra.mxu0 %v1220
        %1334 = vmatpush.msra.mxu0 %v1218
        %1335 = vmatpush.msra.mxu0 %v1216
        %1336 = vmatpush.msra.mxu0 %v1214
        %1337 = vmatpush.msra.mxu0 %v1212
        %1338 = vmatpush.msra.mxu0 %v1210
        %1339 = vmatpush.msra.mxu0 %v1208
        %1340 = vmatpush.msra.mxu0 %v1206
        %1341 = vmatpush.msra.mxu0 %v1204
        %1342 = vmatpush.msra.mxu0 %v1202
        %1343 = vmatmul.f32.gmra.mxu0 %v1163
        %v1344 = vpop.f32.mrf.mxu0
        %v1345 = vadd.f32 %v1322, %v1344
        %1346 = vmatmul.f32.gmra.mxu0 %v1167
        %v1347 = vpop.f32.mrf.mxu0
        %v1348 = vadd.f32 %v1325, %v1347
        %1349 = vdwg.mxu0
        %1350 = vmatpush.msra.mxu0 %v1264
        %1351 = vmatpush.msra.mxu0 %v1262
        %1352 = vmatpush.msra.mxu0 %v1260
        %1353 = vmatpush.msra.mxu0 %v1258
        %1354 = vmatpush.msra.mxu0 %v1256
        %1355 = vmatpush.msra.mxu0 %v1254
        %1356 = vmatpush.msra.mxu0 %v1252
        %1357 = vmatpush.msra.mxu0 %v1250
        %1358 = vmatpush.msra.mxu0 %v1248
        %1359 = vmatpush.msra.mxu0 %v1246
        %1360 = vmatpush.msra.mxu0 %v1244
        %1361 = vmatpush.msra.mxu0 %v1242
        %1362 = vmatpush.msra.mxu0 %v1240
        %1363 = vmatpush.msra.mxu0 %v1238
        %1364 = vmatpush.msra.mxu0 %v1236
        %1365 = vmatpush.msra.mxu0 %v1234
        %1366 = vmatmul.f32.gmra.mxu0 %v1164
        %v1367 = vpop.f32.mrf.mxu0
        %v1368 = vadd.f32 %v1345, %v1367
        %1369 = vmatmul.f32.gmra.mxu0 %v1168
        %v1370 = vpop.f32.mrf.mxu0
        %v1371 = vadd.f32 %v1348, %v1370
        %1372 = vdwg.mxu0
        %1373 = vmatpush.msra.mxu0 %v1296
        %1374 = vmatpush.msra.mxu0 %v1294
        %1375 = vmatpush.msra.mxu0 %v1292
        %1376 = vmatpush.msra.mxu0 %v1290
        %1377 = vmatpush.msra.mxu0 %v1288
        %1378 = vmatpush.msra.mxu0 %v1286
        %1379 = vmatpush.msra.mxu0 %v1284
        %1380 = vmatpush.msra.mxu0 %v1282
        %1381 = vmatpush.msra.mxu0 %v1280
        %1382 = vmatpush.msra.mxu0 %v1278
        %1383 = vmatpush.msra.mxu0 %v1276
        %1384 = vmatpush.msra.mxu0 %v1274
        %1385 = vmatpush.msra.mxu0 %v1272
        %1386 = vmatpush.msra.mxu0 %v1270
        %1387 = vmatpush.msra.mxu0 %v1268
        %1388 = vmatpush.msra.mxu0 %v1266
        %1389 = vmatmul.f32.gmra.mxu0 %v1165
        %v1390 = vpop.f32.mrf.mxu0
        %v1391 = vadd.f32 %v1368, %v1390
        %1392 = vmatmul.f32.gmra.mxu0 %v1169
        %v1393 = vpop.f32.mrf.mxu0
        %v1394 = vadd.f32 %v1371, %v1393
        %1395 = vdwg.mxu0
        %1396 = vmatpush.msra.mxu0 %v1201
        %1397 = vmatpush.msra.mxu0 %v1199
        %1398 = vmatpush.msra.mxu0 %v1197
        %1399 = vmatpush.msra.mxu0 %v1195
        %1400 = vmatpush.msra.mxu0 %v1193
        %1401 = vmatpush.msra.mxu0 %v1191
        %1402 = vmatpush.msra.mxu0 %v1189
        %1403 = vmatpush.msra.mxu0 %v1187
        %1404 = vmatpush.msra.mxu0 %v1185
        %1405 = vmatpush.msra.mxu0 %v1183
        %1406 = vmatpush.msra.mxu0 %v1181
        %1407 = vmatpush.msra.mxu0 %v1179
        %1408 = vmatpush.msra.mxu0 %v1177
        %1409 = vmatpush.msra.mxu0 %v1175
        %1410 = vmatpush.msra.mxu0 %v1173
        %1411 = vmatpush.msra.mxu0 %v1171
        %1412 = vmatmul.f32.gmra.mxu0 %v1162
        %v1413 = vpop.f32.mrf.mxu0
        %v1414 = vadd.f32 %v1301, %v1413
        %1415 = vmatmul.f32.gmra.mxu0 %v1166
        %v1416 = vpop.f32.mrf.mxu0
        %v1417 = vadd.f32 %v1301, %v1416
        %1418 = vdwg.mxu0
        %1419 = vmatpush.msra.mxu0 %v1233
        %1420 = vmatpush.msra.mxu0 %v1231
        %1421 = vmatpush.msra.mxu0 %v1229
        %1422 = vmatpush.msra.mxu0 %v1227
        %1423 = vmatpush.msra.mxu0 %v1225
        %1424 = vmatpush.msra.mxu0 %v1223
        %1425 = vmatpush.msra.mxu0 %v1221
        %1426 = vmatpush.msra.mxu0 %v1219
        %1427 = vmatpush.msra.mxu0 %v1217
        %1428 = vmatpush.msra.mxu0 %v1215
        %1429 = vmatpush.msra.mxu0 %v1213
        %1430 = vmatpush.msra.mxu0 %v1211
        %1431 = vmatpush.msra.mxu0 %v1209
        %1432 = vmatpush.msra.mxu0 %v1207
        %1433 = vmatpush.msra.mxu0 %v1205
        %1434 = vmatpush.msra.mxu0 %v1203
        %1435 = vmatmul.f32.gmra.mxu0 %v1163
        %v1436 = vpop.f32.mrf.mxu0
        %v1437 = vadd.f32 %v1414, %v1436
        %1438 = vmatmul.f32.gmra.mxu0 %v1167
        %v1439 = vpop.f32.mrf.mxu0
        %v1440 = vadd.f32 %v1417, %v1439
        %1441 = vdwg.mxu0
        %1442 = vmatpush.msra.mxu0 %v1265
        %1443 = vmatpush.msra.mxu0 %v1263
        %1444 = vmatpush.msra.mxu0 %v1261
        %1445 = vmatpush.msra.mxu0 %v1259
        %1446 = vmatpush.msra.mxu0 %v1257
        %1447 = vmatpush.msra.mxu0 %v1255
        %1448 = vmatpush.msra.mxu0 %v1253
        %1449 = vmatpush.msra.mxu0 %v1251
        %1450 = vmatpush.msra.mxu0 %v1249
        %1451 = vmatpush.msra.mxu0 %v1247
        %1452 = vmatpush.msra.mxu0 %v1245
        %1453 = vmatpush.msra.mxu0 %v1243
        %1454 = vmatpush.msra.mxu0 %v1241
        %1455 = vmatpush.msra.mxu0 %v1239
        %1456 = vmatpush.msra.mxu0 %v1237
        %1457 = vmatpush.msra.mxu0 %v1235
        %1458 = vmatmul.f32.gmra.mxu0 %v1164
        %v1459 = vpop.f32.mrf.mxu0
        %v1460 = vadd.f32 %v1437, %v1459
        %1461 = vmatmul.f32.gmra.mxu0 %v1168
        %v1462 = vpop.f32.mrf.mxu0
        %v1463 = vadd.f32 %v1440, %v1462
        %1464 = vdwg.mxu0
        %1465 = vmatpush.msra.mxu0 %v1297
        %1466 = vmatpush.msra.mxu0 %v1295
        %1467 = vmatpush.msra.mxu0 %v1293
        %1468 = vmatpush.msra.mxu0 %v1291
        %1469 = vmatpush.msra.mxu0 %v1289
        %1470 = vmatpush.msra.mxu0 %v1287
        %1471 = vmatpush.msra.mxu0 %v1285
        %1472 = vmatpush.msra.mxu0 %v1283
        %1473 = vmatpush.msra.mxu0 %v1281
        %1474 = vmatpush.msra.mxu0 %v1279
        %1475 = vmatpush.msra.mxu0 %v1277
        %1476 = vmatpush.msra.mxu0 %v1275
        %1477 = vmatpush.msra.mxu0 %v1273
        %1478 = vmatpush.msra.mxu0 %v1271
        %1479 = vmatpush.msra.mxu0 %v1269
        %1480 = vmatpush.msra.mxu0 %v1267
        %1481 = vmatmul.f32.gmra.mxu0 %v1165
        %v1482 = vpop.f32.mrf.mxu0
        %v1483 = vadd.f32 %v1460, %v1482
        %1484 = vmatmul.f32.gmra.mxu0 %v1169
        %v1485 = vpop.f32.mrf.mxu0
        %v1486 = vadd.f32 %v1463, %v1485
        %1487 = vdwg.mxu0
        %1488 = vst [vmem:[%s534] sm:$0xff] %v1391
        %1489 = vst [vmem:[%s534 + $0x8] sm:$0xff] %v1483
        %1490 = vst [vmem:[%s534 + $0x10] sm:$0xff] %v1394
        %1491 = vst [vmem:[%s534 + $0x18] sm:$0xff] %v1486
        %s1492 = sand.u32 %s246, 1
        %s1493 = scalar_lea.sflag [#allocation4], %s1492
        %s1494 = sand.u32 %s246, 1
        %s1495 = smul.addr %s1494, 512
        %s1496 = scalar_lea.vmem [#allocation10], %s1495
        %s1497 = sand.u32 %s272, 1
        %s1498 = scalar_lea.sflag [#allocation12], %s1497
        %s1499 = sand.u32 %s272, 1
        %s1500 = smul.addr %s1499, 128
        %s1501 = scalar_lea.vmem [#allocation11], %s1500
        %s1502 = smul.u32 2, %s34
        %p1503 = scmp.lt.s32.totalorder %s1502, 3
        %s1504 = scalar_select %p1503, %s1502, 3
        %s1505 = smul.addr %s1504, 2
        %s1506 = smul.addr %s1505, 8
        %s1507 = scalar_lea.vmem %s11, %s1506
        // Predicated region
        $region73: #{_lambda_.1} parent=55 // pred_check
          %p1508 = pneg %p256
        $region74: #{_lambda_.1} parent=55 // pred_check_branch
          %1510 = sbr.rel (%p1508) target = $region76
        $region75: #{_lambda_.1} parent=55 // pred_region
          %s1511 = smul.u32 32, %s34
          %1513 = vsyncadd %s1493, 0
          %s1514 = smul.addr %s1511, 2
          %s1515 = smul.addr %s1514, 8
          %s1516 = scalar_lea.hbm %s9, %s1515
          %s1517 = sshll.u32 %s1496, 4
          %s1518 = int_to_ptr.vmem [resolvable:$true] %s1517
          %s1519 = sshll.u32 %s1516, 4
          %s1520 = int_to_ptr.hbm [resolvable:$true] %s1519
          %1525 = dma.vmem_to_hbm [thread:$0]  %s1518, 8192, %s1520, %s1493, 256, 256, 16
        $region76: #{_lambda_.1} parent=55 // pred_fallthru
          _
        // Predicated region
        $region77: #{_lambda_.1} parent=55 // pred_check
          %p1526 = pneg %p282
        $region78: #{_lambda_.1} parent=55 // pred_check_branch
          %1528 = sbr.rel (%p1526) target = $region80
        $region79: #{_lambda_.1} parent=55 // pred_region
          %s1529 = smul.u32 8, %s34
          %1531 = vsyncadd %s1498, 0
          %s1532 = smul.addr %s1529, 2
          %s1533 = smul.addr %s1532, 8
          %s1534 = scalar_lea.hbm %s10, %s1533
          %s1535 = sshll.u32 %s1501, 4
          %s1536 = int_to_ptr.vmem [resolvable:$true] %s1535
          %s1537 = sshll.u32 %s1534, 4
          %s1538 = int_to_ptr.hbm [resolvable:$true] %s1537
          %1543 = dma.vmem_to_hbm [thread:$0]  %s1536, 2048, %s1538, %s1498, 256, 256, 16
        $region80: #{_lambda_.1} parent=55 // pred_fallthru
          _
        // Predicated region
        $region81: #{_lambda_.1} parent=55 // pred_check
          %p1544 = pneg %p308
        $region82: #{_lambda_.1} parent=55 // pred_check_branch
          %1546 = sbr.rel (%p1544) target = $region84
        $region83: #{_lambda_.1} parent=55 // pred_region
          %s1547 = smul.u32 2, %s34
        $region84: #{_lambda_.1} parent=55 // pred_fallthru
          _
      $region56: #{_lambda_.1} parent=5 // pred_fallthru
        _
      %p1548 = scmp.le.s32.totalorder 2, %s29
      // Predicated region
      $region85: #{_lambda_.1} parent=5 // pred_check
        %p1549 = pneg %p1548
      $region86: #{_lambda_.1} parent=5 // pred_check_branch
        %1551 = sbr.rel (%p1549) target = $region88
      $region87: #{_lambda_.1} parent=5 // pred_region
        %s1552 = ssub.s32 %s29, 2
        // Predicated region
        $region89: #{_lambda_.1} parent=87 // pred_check
          %p1553 = pneg %p262
        $region90: #{_lambda_.1} parent=87 // pred_check_branch
          %1555 = sbr.rel (%p1553) target = $region92
        $region91: #{_lambda_.1} parent=87 // pred_region
          %s1556 = sand.u32 %s247, 1
          %s1557 = scalar_lea.sflag [#allocation4], %s1556
          %s1558 = sand.u32 %s247, 1
          %s1559 = smul.addr %s1558, 512
          %s1560 = scalar_lea.vmem [#allocation10], %s1559
          %1562 = dma.done %s1557, 8192
        $region92: #{_lambda_.1} parent=87 // pred_fallthru
          _
        // Predicated region
        $region93: #{_lambda_.1} parent=87 // pred_check
          %p1563 = pneg %p288
        $region94: #{_lambda_.1} parent=87 // pred_check_branch
          %1565 = sbr.rel (%p1563) target = $region96
        $region95: #{_lambda_.1} parent=87 // pred_region
          %s1566 = sand.u32 %s273, 1
          %s1567 = scalar_lea.sflag [#allocation12], %s1566
          %s1568 = sand.u32 %s273, 1
          %s1569 = smul.addr %s1568, 128
          %s1570 = scalar_lea.vmem [#allocation11], %s1569
          %1572 = dma.done %s1567, 2048
        $region96: #{_lambda_.1} parent=87 // pred_fallthru
          _
        // Predicated region
        $region97: #{_lambda_.1} parent=87 // pred_check
          %p1573 = pneg %p314
        $region98: #{_lambda_.1} parent=87 // pred_check_branch
          %1575 = sbr.rel (%p1573) target = $region100
        $region99: #{_lambda_.1} parent=87 // pred_region
          %s1576 = smul.u32 2, %s35
          %p1577 = scmp.lt.s32.totalorder %s1576, 3
          %s1578 = scalar_select %p1577, %s1576, 3
          %s1579 = smul.addr %s1578, 2
          %s1580 = smul.addr %s1579, 8
          %s1581 = scalar_lea.vmem %s11, %s1580
        $region100: #{_lambda_.1} parent=87 // pred_fallthru
          _
      $region88: #{_lambda_.1} parent=5 // pred_fallthru
        _
    $region6: #{_lambda_.1} parent=1 // loop_footer
      %s33 = sadd.s32 1, %s29
    $region7: #{_lambda_.1} parent=1 // loop_footer_branch
      %28 = sbr.rel target = $region3
    $region8: #{_lambda_.1} parent=1 // loop_exit
      _
    %1582 = vsyncpa [#allocation3], 1
    %s1583 = scalar_lea.sflag [#allocation3], 1
    %1584 = vsyncpa %s1583, 1
    %1585 = vsyncpa [#allocation6], 1
    %1586 = vsyncpa [#allocation9], 1
    %1587 = vsyncpa [#allocation4], 1
    %s1588 = scalar_lea.sflag [#allocation4], 1
    %1589 = vsyncpa %s1588, 1
    %1590 = vsyncpa [#allocation12], 1
    %s1591 = scalar_lea.sflag [#allocation12], 1
    %1592 = vsyncpa %s1591, 1

</llo_original>
